<compile_context>
chip_gen: v7x
topology: tpu7x:2x2x1
jax: 0.10.0
libtpu: 0.0.40
codegen_flags: <defaults>
</compile_context>

<pallas_src>
import functools
import math

import jax
import jax.numpy as jnp
from jax.experimental import pallas as pl
from jax.experimental.pallas import tpu as pltpu


def _categorical_mlp_kernel(x_ref, w1_ref, b1_ref, w2_ref, b2_ref, w3_ref, b3_ref,
                            logits_ref, *, hidden_dtype):
    """One batch tile: 3 matmuls + tanh + categorical (logsumexp) normalization.

    hidden_dtype: dtype for the matmul inputs / tanh path (f32 everywhere, or
    bf16 on v6e/v7x). MXU accumulation and the logsumexp are always f32.
    """
    x = x_ref[...].astype(hidden_dtype)

    # Hidden layer 1: tanh(x @ W1 + b1)
    h1 = jnp.tanh(
        (jnp.dot(x, w1_ref[...].astype(hidden_dtype),
                 preferred_element_type=jnp.float32) + b1_ref[...]).astype(hidden_dtype)
    )
    # Hidden layer 2: tanh(h1 @ W2 + b2)
    h2 = jnp.tanh(
        (jnp.dot(h1, w2_ref[...].astype(hidden_dtype),
                 preferred_element_type=jnp.float32) + b2_ref[...]).astype(hidden_dtype)
    )
    # Output layer (no nonlinearity): raw logits, f32. W3/b3 are padded to a
    # lane-dense 128-wide output; padded columns have zero weight and -1e30 bias,
    # so they contribute exp(-1e30) = 0 to the logsumexp below.
    logits = jnp.dot(h2, w3_ref[...].astype(hidden_dtype),
                     preferred_element_type=jnp.float32) + b3_ref[...]

    # Categorical(logits=...) normalization: logits - logsumexp(logits, -1).
    # Single exp pass (max-stabilized); probs = exp(norm_logits) is left to the host.
    m = jnp.max(logits, axis=-1, keepdims=True)
    z = jnp.exp(logits - m)
    lse = m + jnp.log(jnp.sum(z, axis=-1, keepdims=True))
    logits_ref[...] = logits - lse
    # TODO(synk): the zero-copy alternative (out_shape (B//16, 128) reinterpreted as
    # (B, 8) outside, with an in-kernel sublane->lane relayout) would avoid the 16x
    # output writeback entirely; skipped for robustness of the reshape lowering.


def _round_up(n, m):
    return ((n + m - 1) // m) * m


def categorical_mlp_forward(x, params, block_batch=2048, hidden_dtype=jnp.float32):
    """Run the Pallas kernel.

    x: (B, input_dim) f32. params: (w1, b1, w2, b2, w3, b3) with weights stored
    (in_features, out_features) and biases (1, out_features).
    Returns normalized logits (B, action_dim) — the Categorical distribution params.
    """
    w1, b1, w2, b2, w3, b3 = params
    B, D = x.shape
    H1, H2, A = w1.shape[1], w2.shape[1], w3.shape[1]

    # --- Lane-dense output: pad the output layer to a multiple of 128 columns. ---
    A_pad = max(128, _round_up(A, 128))
    if A_pad != A:
        w3p = jnp.pad(w3, ((0, 0), (0, A_pad - A)))
        # Padded bias columns MUST be a large negative value (not 0) so they do not
        # corrupt the in-kernel logsumexp over all A_pad lanes.
        b3p = jnp.pad(b3, ((0, 0), (0, A_pad - A)), constant_values=-1e30)
    else:
        w3p, b3p = w3, b3

    # --- Batch tile: multiple of 8 (f32 sublanes), large to amortize step overhead. ---
    tb = min(block_batch, _round_up(B, 8))
    # v7x has two TensorCores sharding the "parallel" batch axis: make sure there are
    # at least 2 grid steps whenever halving the tile still leaves a sizeable tile.
    if pl.cdiv(B, tb) == 1 and B >= 512:
        tb = _round_up(pl.cdiv(B, 2), 8)
    grid = (pl.cdiv(B, tb),)

    def resident(shape):
        # Full-array block, same block index every grid step -> DMA'd once, stays in VMEM.
        return pl.BlockSpec(shape, lambda i: (0, 0))

    flops = 2 * B * (D * H1 + H1 * H2 + H2 * A_pad)
    transcendentals = B * (H1 + H2 + A_pad + 1)            # tanh x2 layers, exp, log
    bytes_accessed = 4 * (x.size + B * A_pad) + 4 * sum(
        int(p.size) for p in (w1, b1, w2, b2, w3p, b3p))

    kernel = functools.partial(_categorical_mlp_kernel, hidden_dtype=hidden_dtype)

    out_padded = pl.pallas_call(
        kernel,
        out_shape=jax.ShapeDtypeStruct((B, A_pad), jnp.float32),
        grid=grid,
        in_specs=[
            pl.BlockSpec((tb, D), lambda i: (i, 0)),   # x: pipelined batch tiles
            resident(w1.shape), resident(b1.shape),
            resident(w2.shape), resident(b2.shape),
            resident(w3p.shape), resident(b3p.shape),
        ],
        out_specs=pl.BlockSpec((tb, A_pad), lambda i: (i, 0)),
        compiler_params=pltpu.CompilerParams(
            # TODO(synk): on v7x, pltpu.CORE_PARALLEL (or pl.core_map over a 2-core
            # mesh) may shard the batch axis more aggressively than "parallel".
            dimension_semantics=("parallel",),
        ),
        cost_estimate=pl.CostEstimate(
            flops=flops,
            transcendentals=transcendentals,
            bytes_accessed=bytes_accessed,
        ),
    )(x, w1, b1, w2, b2, w3p, b3p)

    # Drop the padded logit columns (tiny slice in the XLA wrapper).
    return out_padded[:, :A]


def xavier_uniform(key, fan_in, fan_out):
    bound = math.sqrt(6.0 / (fan_in + fan_out))
    return jax.random.uniform(key, (fan_in, fan_out), jnp.float32, -bound, bound)


def init_params(key, input_dim, hidden_sizes, output_dim):
    """Matches the module defaults: xavier_uniform_ weights, zeros_ biases.
    Biases kept 2D (1, n) for TPU layout."""
    dims = (input_dim,) + tuple(hidden_sizes) + (output_dim,)
    keys = jax.random.split(key, len(dims) - 1)
    params = []
    for k, d_in, d_out in zip(keys, dims[:-1], dims[1:]):
        params.append(xavier_uniform(k, d_in, d_out))
        params.append(jnp.zeros((1, d_out), jnp.float32))
    return tuple(params)


if __name__ == "__main__":
    # Shapes consistent with the module's forward: (batch, input_dim) -> (batch, action_dim).
    batch = 1024                 # splits into 2 grid steps -> exercises the batch pipeline
    input_dim = 16
    hidden_sizes = (64, 64)      # module default
    output_dim = 8

    key = jax.random.PRNGKey(0)
    k_x, k_p = jax.random.split(key)

    x = jax.random.normal(k_x, (batch, input_dim), jnp.float32)
    params = init_params(k_p, input_dim, hidden_sizes, output_dim)

    # Default all-f32 path (correct choice for v5e).
    norm_logits = categorical_mlp_forward(x, params)
    jax.block_until_ready(norm_logits)
    probs = jnp.exp(norm_logits)   # Categorical.probs, computed outside the kernel

    # Reference in plain JAX (highest precision so the f32 MXU matmuls match).
    w1, b1, w2, b2, w3, b3 = params
    hp = jax.lax.Precision.HIGHEST
    h1 = jnp.tanh(jnp.dot(x, w1, precision=hp) + b1)
    h2 = jnp.tanh(jnp.dot(h1, w2, precision=hp) + b2)
    ref_logits = jnp.dot(h2, w3, precision=hp) + b3
    ref_norm = ref_logits - jax.scipy.special.logsumexp(ref_logits, axis=-1, keepdims=True)
    ref_probs = jax.nn.softmax(ref_logits, axis=-1)

    assert norm_logits.shape == (batch, output_dim)
    assert jnp.allclose(norm_logits, ref_norm, atol=1e-4), "normalized logits mismatch"
    assert jnp.allclose(probs, ref_probs, atol=1e-4), "probs mismatch"
    assert jnp.allclose(jnp.sum(probs, axis=-1), 1.0, atol=1e-5), "probs not normalized"

    # Optional bf16 hidden path (v6e/v7x EUP/VPU win); looser tolerance for bf16 rounding.
    norm_logits_bf16 = categorical_mlp_forward(x, params, hidden_dtype=jnp.bfloat16)
    jax.block_until_ready(norm_logits_bf16)
    assert norm_logits_bf16.shape == (batch, output_dim)
    assert jnp.allclose(norm_logits_bf16, ref_norm, atol=5e-2), "bf16 normalized logits mismatch"

    # TODO(synk): Categorical.sample()/log_prob (random draws) are left to the host/JAX
    # side; the kernel returns the distribution parameters (normalized logits).
    print("KERNEL_OK")
</pallas_src>

<mosaic_0001>
module attributes {stable_mosaic.version = 11 : i64} {
  func.func @_categorical_mlp_kernel(%arg0: i32, %arg1: memref<512x16xf32, #tpu.memory_space<vmem>>, %arg2: memref<16x64xf32, #tpu.memory_space<vmem>>, %arg3: memref<1x64xf32, #tpu.memory_space<vmem>>, %arg4: memref<64x64xf32, #tpu.memory_space<vmem>>, %arg5: memref<1x64xf32, #tpu.memory_space<vmem>>, %arg6: memref<64x128xf32, #tpu.memory_space<vmem>>, %arg7: memref<1x128xf32, #tpu.memory_space<vmem>>, %arg8: memref<512x128xf32, #tpu.memory_space<vmem>>) attributes {dimension_semantics = [#tpu.dimension_semantics<parallel>], iteration_bounds = array<i64: 2>, scalar_prefetch = 0 : i64, scratch_operands = 0 : i64, tpu.core_type = #tpu.core_type<tc>, window_params = [{transform_indices = @transform_0, window_bounds = array<i64: 512, 16>}, {pipeline_mode = #tpu.pipeline_mode<synchronous>, transform_indices = @transform_1, window_bounds = array<i64: 16, 64>}, {pipeline_mode = #tpu.pipeline_mode<synchronous>, transform_indices = @transform_2, window_bounds = array<i64: 1, 64>}, {pipeline_mode = #tpu.pipeline_mode<synchronous>, transform_indices = @transform_3, window_bounds = array<i64: 64, 64>}, {pipeline_mode = #tpu.pipeline_mode<synchronous>, transform_indices = @transform_4, window_bounds = array<i64: 1, 64>}, {pipeline_mode = #tpu.pipeline_mode<synchronous>, transform_indices = @transform_5, window_bounds = array<i64: 64, 128>}, {pipeline_mode = #tpu.pipeline_mode<synchronous>, transform_indices = @transform_6, window_bounds = array<i64: 1, 128>}, {transform_indices = @transform_7, window_bounds = array<i64: 512, 128>}]} {
    %c0 = arith.constant 0 : index
    %c0_0 = arith.constant 0 : index
    %0 = vector.load %arg1[%c0, %c0_0] : memref<512x16xf32, #tpu.memory_space<vmem>>, vector<512x16xf32>
    %c0_1 = arith.constant 0 : index
    %c0_2 = arith.constant 0 : index
    %1 = vector.load %arg2[%c0_1, %c0_2] : memref<16x64xf32, #tpu.memory_space<vmem>>, vector<16x64xf32>
    %cst = arith.constant dense<0.000000e+00> : vector<512x64xf32>
    %2 = tpu.matmul %0, %1, %cst {dimension_numbers = #tpu.dot_dimension_numbers<[1], [0], [0], [1], [0, 0, 1, 1], [], []>} : vector<512x16xf32>, vector<16x64xf32>, vector<512x64xf32> -> vector<512x64xf32>
    %c0_3 = arith.constant 0 : index
    %c0_4 = arith.constant 0 : index
    %3 = vector.load %arg3[%c0_3, %c0_4] : memref<1x64xf32, #tpu.memory_space<vmem>>, vector<1x64xf32>
    %4 = vector.broadcast %3 : vector<1x64xf32> to vector<512x64xf32>
    %5 = arith.addf %2, %4 : vector<512x64xf32>
    %6 = math.tanh %5 : vector<512x64xf32>
    %c0_5 = arith.constant 0 : index
    %c0_6 = arith.constant 0 : index
    %7 = vector.load %arg4[%c0_5, %c0_6] : memref<64x64xf32, #tpu.memory_space<vmem>>, vector<64x64xf32>
    %cst_7 = arith.constant dense<0.000000e+00> : vector<512x64xf32>
    %8 = tpu.matmul %6, %7, %cst_7 {dimension_numbers = #tpu.dot_dimension_numbers<[1], [0], [0], [1], [0, 0, 1, 1], [], []>} : vector<512x64xf32>, vector<64x64xf32>, vector<512x64xf32> -> vector<512x64xf32>
    %c0_8 = arith.constant 0 : index
    %c0_9 = arith.constant 0 : index
    %9 = vector.load %arg5[%c0_8, %c0_9] : memref<1x64xf32, #tpu.memory_space<vmem>>, vector<1x64xf32>
    %10 = vector.broadcast %9 : vector<1x64xf32> to vector<512x64xf32>
    %11 = arith.addf %8, %10 : vector<512x64xf32>
    %12 = math.tanh %11 : vector<512x64xf32>
    %c0_10 = arith.constant 0 : index
    %c0_11 = arith.constant 0 : index
    %13 = vector.load %arg6[%c0_10, %c0_11] : memref<64x128xf32, #tpu.memory_space<vmem>>, vector<64x128xf32>
    %cst_12 = arith.constant dense<0.000000e+00> : vector<512x128xf32>
    %14 = tpu.matmul %12, %13, %cst_12 {dimension_numbers = #tpu.dot_dimension_numbers<[1], [0], [0], [1], [0, 0, 1, 1], [], []>} : vector<512x64xf32>, vector<64x128xf32>, vector<512x128xf32> -> vector<512x128xf32>
    %c0_13 = arith.constant 0 : index
    %c0_14 = arith.constant 0 : index
    %15 = vector.load %arg7[%c0_13, %c0_14] : memref<1x128xf32, #tpu.memory_space<vmem>>, vector<1x128xf32>
    %16 = vector.broadcast %15 : vector<1x128xf32> to vector<512x128xf32>
    %17 = arith.addf %14, %16 : vector<512x128xf32>
    %cst_15 = arith.constant dense<0xFF800000> : vector<512xf32>
    %18 = vector.multi_reduction <maximumf>, %17, %cst_15 [1] : vector<512x128xf32> to vector<512xf32>
    %19 = vector.shape_cast %18 : vector<512xf32> to vector<512x1xf32>
    %20 = vector.broadcast %19 : vector<512x1xf32> to vector<512x128xf32>
    %21 = arith.subf %17, %20 : vector<512x128xf32>
    %22 = math.exp %21 : vector<512x128xf32>
    %cst_16 = arith.constant dense<0.000000e+00> : vector<512xf32>
    %23 = vector.multi_reduction <add>, %22, %cst_16 [1] : vector<512x128xf32> to vector<512xf32>
    %24 = vector.shape_cast %23 : vector<512xf32> to vector<512x1xf32>
    %25 = math.log %24 : vector<512x1xf32>
    %26 = arith.addf %19, %25 : vector<512x1xf32>
    %27 = vector.broadcast %26 : vector<512x1xf32> to vector<512x128xf32>
    %28 = arith.subf %17, %27 : vector<512x128xf32>
    %c0_17 = arith.constant 0 : index
    %c0_18 = arith.constant 0 : index
    %29 = vector.load %arg8[%c0_17, %c0_18] : memref<512x128xf32, #tpu.memory_space<vmem>>, vector<512x128xf32>
    tpu.vector_store %arg8[%c0_17, %c0_18], %28 {strides = array<i32>} : memref<512x128xf32, #tpu.memory_space<vmem>>, vector<512x128xf32>,
    return
  }
  func.func @transform_0(%arg0: i32) -> (i32, i32) {
    %c0_i32 = arith.constant 0 : i32
    %c0_i32_0 = arith.constant 0 : i32
    return %arg0, %c0_i32 : i32, i32
  }
  func.func @transform_1(%arg0: i32) -> (i32, i32) {
    %c0_i32 = arith.constant 0 : i32
    %c0_i32_0 = arith.constant 0 : i32
    %c0_i32_1 = arith.constant 0 : i32
    return %c0_i32, %c0_i32_0 : i32, i32
  }
  func.func @transform_2(%arg0: i32) -> (i32, i32) {
    %c0_i32 = arith.constant 0 : i32
    %c0_i32_0 = arith.constant 0 : i32
    %c0_i32_1 = arith.constant 0 : i32
    return %c0_i32, %c0_i32_0 : i32, i32
  }
  func.func @transform_3(%arg0: i32) -> (i32, i32) {
    %c0_i32 = arith.constant 0 : i32
    %c0_i32_0 = arith.constant 0 : i32
    %c0_i32_1 = arith.constant 0 : i32
    return %c0_i32, %c0_i32_0 : i32, i32
  }
  func.func @transform_4(%arg0: i32) -> (i32, i32) {
    %c0_i32 = arith.constant 0 : i32
    %c0_i32_0 = arith.constant 0 : i32
    %c0_i32_1 = arith.constant 0 : i32
    return %c0_i32, %c0_i32_0 : i32, i32
  }
  func.func @transform_5(%arg0: i32) -> (i32, i32) {
    %c0_i32 = arith.constant 0 : i32
    %c0_i32_0 = arith.constant 0 : i32
    %c0_i32_1 = arith.constant 0 : i32
    return %c0_i32, %c0_i32_0 : i32, i32
  }
  func.func @transform_6(%arg0: i32) -> (i32, i32) {
    %c0_i32 = arith.constant 0 : i32
    %c0_i32_0 = arith.constant 0 : i32
    %c0_i32_1 = arith.constant 0 : i32
    return %c0_i32, %c0_i32_0 : i32, i32
  }
  func.func @transform_7(%arg0: i32) -> (i32, i32) {
    %c0_i32 = arith.constant 0 : i32
    %c0_i32_0 = arith.constant 0 : i32
    return %arg0, %c0_i32 : i32, i32
  }
}

</mosaic_0001>

<llo_original>
// kernel: tpu_custom_call.1
$region0: #{tpu_custom_call.1}
  #allocation0 [shape = 'u32[]', space=smem, size = 0x4, offset = 0x4, fixed_abs, tag = 'smem constant byte address 0x4 - core index']
  #allocation1 [shape = 'u32[144,128]{1,0:T(1,128)}', space=vmem, size = 0x12000, scoped, tag = 'internal scratch']
  %s0 = inlined_call_operand.vmem [shape: f32[1024,16], index: 0, kind: input, shape index: {}]
  %s1 = inlined_call_operand.vmem [shape: f32[16,64], index: 1, kind: input, shape index: {}]
  %s2 = inlined_call_operand.vmem [shape: f32[1,64], index: 2, kind: input, shape index: {}]
  %s3 = inlined_call_operand.vmem [shape: f32[64,64], index: 3, kind: input, shape index: {}]
  %s4 = inlined_call_operand.vmem [shape: f32[1,64], index: 4, kind: input, shape index: {}]
  %s5 = inlined_call_operand.vmem [shape: f32[64,128], index: 5, kind: input, shape index: {}]
  %s6 = inlined_call_operand.vmem [shape: f32[1,128], index: 6, kind: input, shape index: {}]
  %s7 = inlined_call_operand.hbm [shape: f32[1024,128], index: 7, kind: output, shape index: {}]
  %s8 = sld [smem:[#allocation0]]
  $region61: #{tpu_custom_call.1} parent=0
    _
  %s10 = ssub.s32 1, %s8
  %s11 = scalar_select 0, %s10, %s8
  $region1: #{tpu_custom_call.1} parent=0
    #allocation2 [shape = 'u8[524288]{0}', space=vmem, size = 0x80000, scoped, tag = 'output window, operand 0']
    #allocation3 [shape = 's32[2]{0}', space=sflag, size = 0x8, scoped, tag = 'scoped memory for tpu_custom_call.1']
    %12 = vsyncpa [#allocation3], 0
    %s13 = scalar_lea.sflag [#allocation3], 1
    %14 = vsyncpa %s13, 0
    loop: start=0, step=1, limit=4
    $region2: #{tpu_custom_call.1} parent=1 // loop_pre_header
      _
    $region3: #{tpu_custom_call.1} parent=1 // loop_header
      %s16 = sphi 0, %s20
      %p17 = scmp.ge.s32.totalorder %s16, 4
      %s26 = sphi 0, %s28
      %s29 = sphi 0, %s26
      %s30 = sphi 0, %s29
      %s46 = sphi 0, %s30
      %s50 = sphi 0, %s50
      %s52 = sphi 0, %s50
      %s53 = sphi 0, %s52
      %s67 = sphi 0, %s53
      %s71 = sphi 0, %s71
      %s73 = sphi 0, %s71
      %s74 = sphi 0, %s73
      %s88 = sphi 0, %s74
      %s92 = sphi 0, %s92
      %s94 = sphi 0, %s92
      %s95 = sphi 0, %s94
      %s109 = sphi 0, %s95
      %s113 = sphi 0, %s113
      %s115 = sphi 0, %s113
      %s116 = sphi 0, %s115
      %s130 = sphi 0, %s116
      %s134 = sphi 0, %s134
      %s136 = sphi 0, %s134
      %s137 = sphi 0, %s136
      %s151 = sphi 0, %s137
      %s155 = sphi 0, %s155
      %s157 = sphi 0, %s155
      %s158 = sphi 0, %s157
      %s172 = sphi 0, %s158
      %s178 = sphi 0, %s180
      %s181 = sphi 0, %s178
      %s182 = sphi 0, %s181
      %s198 = sphi 0, %s182
    $region4: #{tpu_custom_call.1} parent=1 // loop_header_branch
      %19 = sbr.rel (%p17) target = $region8
    $region5: #{tpu_custom_call.1} parent=1 // loop_body
      %s21 = ssub.s32 %s16, 1
      %s22 = ssub.s32 %s16, 2
      %s23 = sadd.s32 %s16, 1
      %s24 = ssub.s32 %s16, %s23
      %p25 = scmp.eq.s32.totalorder %s24, 0
      %s27 = sadd.s32 %s26, 1
      %s28 = scalar_select %p25, %s26, %s27
      %p31 = pneg %p25
      %p32 = scmp.eq.s32.totalorder %s16, 1
      %p33 = por %p31, %p32
      %p34 = scmp.ne.s32.totalorder %s26, %s29
      %p35 = scmp.eq.s32.totalorder %s16, 0
      %p36 = por %p34, %p35
      %p37 = scmp.ne.s32.totalorder %s26, %s29
      %p38 = scmp.eq.s32.totalorder %s21, 1
      %p39 = por %p37, %p38
      %p40 = scmp.ne.s32.totalorder %s29, %s30
      %p41 = scmp.eq.s32.totalorder %s21, 0
      %p42 = por %p40, %p41
      %p43 = scmp.ne.s32.totalorder %s29, %s30
      %p44 = scmp.eq.s32.totalorder %s22, 1
      %p45 = por %p43, %p44
      %p47 = scmp.ne.s32.totalorder %s30, %s46
      %p48 = scmp.eq.s32.totalorder %s22, 0
      %p49 = por %p47, %p48
      %s51 = sadd.s32 %s50, 1
      %p54 = scmp.eq.s32.totalorder %s16, 1
      %p55 = scmp.ne.s32.totalorder %s50, %s52
      %p56 = scmp.eq.s32.totalorder %s16, 0
      %p57 = por %p55, %p56
      %p58 = scmp.ne.s32.totalorder %s50, %s52
      %p59 = scmp.eq.s32.totalorder %s21, 1
      %p60 = por %p58, %p59
      %p61 = scmp.ne.s32.totalorder %s52, %s53
      %p62 = scmp.eq.s32.totalorder %s21, 0
      %p63 = por %p61, %p62
      %p64 = scmp.ne.s32.totalorder %s52, %s53
      %p65 = scmp.eq.s32.totalorder %s22, 1
      %p66 = por %p64, %p65
      %p68 = scmp.ne.s32.totalorder %s53, %s67
      %p69 = scmp.eq.s32.totalorder %s22, 0
      %p70 = por %p68, %p69
      %s72 = sadd.s32 %s71, 1
      %p75 = scmp.eq.s32.totalorder %s16, 1
      %p76 = scmp.ne.s32.totalorder %s71, %s73
      %p77 = scmp.eq.s32.totalorder %s16, 0
      %p78 = por %p76, %p77
      %p79 = scmp.ne.s32.totalorder %s71, %s73
      %p80 = scmp.eq.s32.totalorder %s21, 1
      %p81 = por %p79, %p80
      %p82 = scmp.ne.s32.totalorder %s73, %s74
      %p83 = scmp.eq.s32.totalorder %s21, 0
      %p84 = por %p82, %p83
      %p85 = scmp.ne.s32.totalorder %s73, %s74
      %p86 = scmp.eq.s32.totalorder %s22, 1
      %p87 = por %p85, %p86
      %p89 = scmp.ne.s32.totalorder %s74, %s88
      %p90 = scmp.eq.s32.totalorder %s22, 0
      %p91 = por %p89, %p90
      %s93 = sadd.s32 %s92, 1
      %p96 = scmp.eq.s32.totalorder %s16, 1
      %p97 = scmp.ne.s32.totalorder %s92, %s94
      %p98 = scmp.eq.s32.totalorder %s16, 0
      %p99 = por %p97, %p98
      %p100 = scmp.ne.s32.totalorder %s92, %s94
      %p101 = scmp.eq.s32.totalorder %s21, 1
      %p102 = por %p100, %p101
      %p103 = scmp.ne.s32.totalorder %s94, %s95
      %p104 = scmp.eq.s32.totalorder %s21, 0
      %p105 = por %p103, %p104
      %p106 = scmp.ne.s32.totalorder %s94, %s95
      %p107 = scmp.eq.s32.totalorder %s22, 1
      %p108 = por %p106, %p107
      %p110 = scmp.ne.s32.totalorder %s95, %s109
      %p111 = scmp.eq.s32.totalorder %s22, 0
      %p112 = por %p110, %p111
      %s114 = sadd.s32 %s113, 1
      %p117 = scmp.eq.s32.totalorder %s16, 1
      %p118 = scmp.ne.s32.totalorder %s113, %s115
      %p119 = scmp.eq.s32.totalorder %s16, 0
      %p120 = por %p118, %p119
      %p121 = scmp.ne.s32.totalorder %s113, %s115
      %p122 = scmp.eq.s32.totalorder %s21, 1
      %p123 = por %p121, %p122
      %p124 = scmp.ne.s32.totalorder %s115, %s116
      %p125 = scmp.eq.s32.totalorder %s21, 0
      %p126 = por %p124, %p125
      %p127 = scmp.ne.s32.totalorder %s115, %s116
      %p128 = scmp.eq.s32.totalorder %s22, 1
      %p129 = por %p127, %p128
      %p131 = scmp.ne.s32.totalorder %s116, %s130
      %p132 = scmp.eq.s32.totalorder %s22, 0
      %p133 = por %p131, %p132
      %s135 = sadd.s32 %s134, 1
      %p138 = scmp.eq.s32.totalorder %s16, 1
      %p139 = scmp.ne.s32.totalorder %s134, %s136
      %p140 = scmp.eq.s32.totalorder %s16, 0
      %p141 = por %p139, %p140
      %p142 = scmp.ne.s32.totalorder %s134, %s136
      %p143 = scmp.eq.s32.totalorder %s21, 1
      %p144 = por %p142, %p143
      %p145 = scmp.ne.s32.totalorder %s136, %s137
      %p146 = scmp.eq.s32.totalorder %s21, 0
      %p147 = por %p145, %p146
      %p148 = scmp.ne.s32.totalorder %s136, %s137
      %p149 = scmp.eq.s32.totalorder %s22, 1
      %p150 = por %p148, %p149
      %p152 = scmp.ne.s32.totalorder %s137, %s151
      %p153 = scmp.eq.s32.totalorder %s22, 0
      %p154 = por %p152, %p153
      %s156 = sadd.s32 %s155, 1
      %p159 = scmp.eq.s32.totalorder %s16, 1
      %p160 = scmp.ne.s32.totalorder %s155, %s157
      %p161 = scmp.eq.s32.totalorder %s16, 0
      %p162 = por %p160, %p161
      %p163 = scmp.ne.s32.totalorder %s155, %s157
      %p164 = scmp.eq.s32.totalorder %s21, 1
      %p165 = por %p163, %p164
      %p166 = scmp.ne.s32.totalorder %s157, %s158
      %p167 = scmp.eq.s32.totalorder %s21, 0
      %p168 = por %p166, %p167
      %p169 = scmp.ne.s32.totalorder %s157, %s158
      %p170 = scmp.eq.s32.totalorder %s22, 1
      %p171 = por %p169, %p170
      %p173 = scmp.ne.s32.totalorder %s158, %s172
      %p174 = scmp.eq.s32.totalorder %s22, 0
      %p175 = por %p173, %p174
      %s176 = ssub.s32 %s16, %s23
      %p177 = scmp.eq.s32.totalorder %s176, 0
      %s179 = sadd.s32 %s178, 1
      %s180 = scalar_select %p177, %s178, %s179
      %p183 = pneg %p177
      %p184 = scmp.eq.s32.totalorder %s16, 1
      %p185 = por %p183, %p184
      %p186 = scmp.ne.s32.totalorder %s178, %s181
      %p187 = scmp.eq.s32.totalorder %s16, 0
      %p188 = por %p186, %p187
      %p189 = scmp.ne.s32.totalorder %s178, %s181
      %p190 = scmp.eq.s32.totalorder %s21, 1
      %p191 = por %p189, %p190
      %p192 = scmp.ne.s32.totalorder %s181, %s182
      %p193 = scmp.eq.s32.totalorder %s21, 0
      %p194 = por %p192, %p193
      %p195 = scmp.ne.s32.totalorder %s181, %s182
      %p196 = scmp.eq.s32.totalorder %s22, 1
      %p197 = por %p195, %p196
      %p199 = scmp.ne.s32.totalorder %s182, %s198
      %p200 = scmp.eq.s32.totalorder %s22, 0
      %p201 = por %p199, %p200
      %p202 = scmp.le.s32.totalorder 1, %s16
      %p203 = scmp.lt.s32.totalorder %s16, 3
      %p204 = pnand %p202, %p203
      %p205 = pneg %p204
      // Predicated region
      $region9: #{tpu_custom_call.1} parent=5 // pred_check
        _
      $region10: #{tpu_custom_call.1} parent=5 // pred_check_branch
        %207 = sbr.rel (%p204) target = $region12
      $region11: #{tpu_custom_call.1} parent=5 // pred_region
        %s208 = ssub.s32 %s16, 1
        // Predicated region
        $region13: #{tpu_custom_call.1} parent=11 // pred_check
          %p209 = pneg %p63
        $region14: #{tpu_custom_call.1} parent=11 // pred_check_branch
          %211 = sbr.rel (%p209) target = $region16
        $region15: #{tpu_custom_call.1} parent=11 // pred_region
          _
        $region16: #{tpu_custom_call.1} parent=11 // pred_fallthru
          _
        // Predicated region
        $region17: #{tpu_custom_call.1} parent=11 // pred_check
          %p212 = pneg %p84
        $region18: #{tpu_custom_call.1} parent=11 // pred_check_branch
          %214 = sbr.rel (%p212) target = $region20
        $region19: #{tpu_custom_call.1} parent=11 // pred_region
          _
        $region20: #{tpu_custom_call.1} parent=11 // pred_fallthru
          _
        // Predicated region
        $region21: #{tpu_custom_call.1} parent=11 // pred_check
          %p215 = pneg %p105
        $region22: #{tpu_custom_call.1} parent=11 // pred_check_branch
          %217 = sbr.rel (%p215) target = $region24
        $region23: #{tpu_custom_call.1} parent=11 // pred_region
          _
        $region24: #{tpu_custom_call.1} parent=11 // pred_fallthru
          _
        // Predicated region
        $region25: #{tpu_custom_call.1} parent=11 // pred_check
          %p218 = pneg %p126
        $region26: #{tpu_custom_call.1} parent=11 // pred_check_branch
          %220 = sbr.rel (%p218) target = $region28
        $region27: #{tpu_custom_call.1} parent=11 // pred_region
          _
        $region28: #{tpu_custom_call.1} parent=11 // pred_fallthru
          _
        // Predicated region
        $region29: #{tpu_custom_call.1} parent=11 // pred_check
          %p221 = pneg %p147
        $region30: #{tpu_custom_call.1} parent=11 // pred_check_branch
          %223 = sbr.rel (%p221) target = $region32
        $region31: #{tpu_custom_call.1} parent=11 // pred_region
          _
        $region32: #{tpu_custom_call.1} parent=11 // pred_fallthru
          _
        // Predicated region
        $region33: #{tpu_custom_call.1} parent=11 // pred_check
          %p224 = pneg %p168
        $region34: #{tpu_custom_call.1} parent=11 // pred_check_branch
          %226 = sbr.rel (%p224) target = $region36
        $region35: #{tpu_custom_call.1} parent=11 // pred_region
          _
        $region36: #{tpu_custom_call.1} parent=11 // pred_fallthru
          _
      $region12: #{tpu_custom_call.1} parent=5 // pred_fallthru
        _
      %p227 = scmp.lt.s32.totalorder %s16, 2
      // Predicated region
      $region37: #{tpu_custom_call.1} parent=5 // pred_check
        %p228 = pneg %p227
      $region38: #{tpu_custom_call.1} parent=5 // pred_check_branch
        %230 = sbr.rel (%p228) target = $region40
      $region39: #{tpu_custom_call.1} parent=5 // pred_region
        // Predicated region
        $region41: #{tpu_custom_call.1} parent=39 // pred_check
          %p231 = pneg %p36
        $region42: #{tpu_custom_call.1} parent=39 // pred_check_branch
          %233 = sbr.rel (%p231) target = $region44
        $region43: #{tpu_custom_call.1} parent=39 // pred_region
          %s234 = smul.u32 64, %s16
          %p235 = scmp.lt.s32.totalorder %s234, 127
          %s236 = scalar_select %p235, %s234, 127
          %s237 = smul.addr %s236, 8
          %s238 = scalar_lea.vmem %s0, %s237
          %s239 = smul.u32 64, %s16
        $region44: #{tpu_custom_call.1} parent=39 // pred_fallthru
          _
      $region40: #{tpu_custom_call.1} parent=5 // pred_fallthru
        _
      %p240 = scmp.le.s32.totalorder 1, %s16
      %p241 = scmp.lt.s32.totalorder %s16, 3
      %p242 = pnand %p240, %p241
      %p243 = pneg %p242
      // Predicated region
      $region45: #{tpu_custom_call.1} parent=5 // pred_check
        _
      $region46: #{tpu_custom_call.1} parent=5 // pred_check_branch
        %245 = sbr.rel (%p242) target = $region48
      $region47: #{tpu_custom_call.1} parent=5 // pred_region
        %s246 = ssub.s32 %s16, 1
        %s247 = smul.u32 64, %s21
        %p248 = scmp.lt.s32.totalorder %s247, 127
        %s249 = scalar_select %p248, %s247, 127
        %s250 = smul.addr %s249, 8
        %s251 = scalar_lea.vmem %s0, %s250
        %p252 = pneg %p42
        %p253 = pneg %p39
        %p254 = pneg %p63
        %p255 = pneg %p60
        %p256 = pneg %p84
        %p257 = pneg %p81
        %p258 = pneg %p105
        %p259 = pneg %p102
        %p260 = pneg %p126
        %p261 = pneg %p123
        %p262 = pneg %p147
        %p263 = pneg %p144
        %p264 = pneg %p168
        %p265 = pneg %p165
        %p266 = pneg %p194
        %p267 = pneg %p191
        %s268 = sand.u32 %s181, 1
        %s269 = scalar_lea.sflag [#allocation3], %s268
        %s270 = sand.u32 %s181, 1
        %s271 = smul.addr %s270, 512
        %s272 = scalar_lea.vmem [#allocation2], %s271
        %s273 = smul.u32 64, %s21
        %p274 = scmp.lt.s32.totalorder %s273, 127
        %s275 = scalar_select %p274, %s273, 127
        %s276 = smul.addr %s275, 8
        %s277 = scalar_lea.vmem %s0, %s276
        %s278 = smul.u32 64, %s21
        %s279 = smul.u32 64, %s21
        %v280 = vld [vmem:[%s277] sm:$0xff]
        %v281 = vld [vmem:[%s277 + $0x8] sm:$0xff]
        %v282 = vld [vmem:[%s277 + $0x10] sm:$0xff]
        %v283 = vld [vmem:[%s277 + $0x18] sm:$0xff]
        %v284 = vld [vmem:[%s277 + $0x20] sm:$0xff]
        %v285 = vld [vmem:[%s277 + $0x28] sm:$0xff]
        %v286 = vld [vmem:[%s277 + $0x30] sm:$0xff]
        %v287 = vld [vmem:[%s277 + $0x38] sm:$0xff]
        %v288 = vld [vmem:[%s277 + $0x40] sm:$0xff]
        %v289 = vld [vmem:[%s277 + $0x48] sm:$0xff]
        %v290 = vld [vmem:[%s277 + $0x50] sm:$0xff]
        %v291 = vld [vmem:[%s277 + $0x58] sm:$0xff]
        %v292 = vld [vmem:[%s277 + $0x60] sm:$0xff]
        %v293 = vld [vmem:[%s277 + $0x68] sm:$0xff]
        %v294 = vld [vmem:[%s277 + $0x70] sm:$0xff]
        %v295 = vld [vmem:[%s277 + $0x78] sm:$0xff]
        %v296 = vld [vmem:[%s277 + $0x80] sm:$0xff]
        %v297 = vld [vmem:[%s277 + $0x88] sm:$0xff]
        %v298 = vld [vmem:[%s277 + $0x90] sm:$0xff]
        %v299 = vld [vmem:[%s277 + $0x98] sm:$0xff]
        %v300 = vld [vmem:[%s277 + $0xa0] sm:$0xff]
        %v301 = vld [vmem:[%s277 + $0xa8] sm:$0xff]
        %v302 = vld [vmem:[%s277 + $0xb0] sm:$0xff]
        %v303 = vld [vmem:[%s277 + $0xb8] sm:$0xff]
        %v304 = vld [vmem:[%s277 + $0xc0] sm:$0xff]
        %v305 = vld [vmem:[%s277 + $0xc8] sm:$0xff]
        %v306 = vld [vmem:[%s277 + $0xd0] sm:$0xff]
        %v307 = vld [vmem:[%s277 + $0xd8] sm:$0xff]
        %v308 = vld [vmem:[%s277 + $0xe0] sm:$0xff]
        %v309 = vld [vmem:[%s277 + $0xe8] sm:$0xff]
        %v310 = vld [vmem:[%s277 + $0xf0] sm:$0xff]
        %v311 = vld [vmem:[%s277 + $0xf8] sm:$0xff]
        %v312 = vld [vmem:[%s277 + $0x100] sm:$0xff]
        %v313 = vld [vmem:[%s277 + $0x108] sm:$0xff]
        %v314 = vld [vmem:[%s277 + $0x110] sm:$0xff]
        %v315 = vld [vmem:[%s277 + $0x118] sm:$0xff]
        %v316 = vld [vmem:[%s277 + $0x120] sm:$0xff]
        %v317 = vld [vmem:[%s277 + $0x128] sm:$0xff]
        %v318 = vld [vmem:[%s277 + $0x130] sm:$0xff]
        %v319 = vld [vmem:[%s277 + $0x138] sm:$0xff]
        %v320 = vld [vmem:[%s277 + $0x140] sm:$0xff]
        %v321 = vld [vmem:[%s277 + $0x148] sm:$0xff]
        %v322 = vld [vmem:[%s277 + $0x150] sm:$0xff]
        %v323 = vld [vmem:[%s277 + $0x158] sm:$0xff]
        %v324 = vld [vmem:[%s277 + $0x160] sm:$0xff]
        %v325 = vld [vmem:[%s277 + $0x168] sm:$0xff]
        %v326 = vld [vmem:[%s277 + $0x170] sm:$0xff]
        %v327 = vld [vmem:[%s277 + $0x178] sm:$0xff]
        %v328 = vld [vmem:[%s277 + $0x180] sm:$0xff]
        %v329 = vld [vmem:[%s277 + $0x188] sm:$0xff]
        %v330 = vld [vmem:[%s277 + $0x190] sm:$0xff]
        %v331 = vld [vmem:[%s277 + $0x198] sm:$0xff]
        %v332 = vld [vmem:[%s277 + $0x1a0] sm:$0xff]
        %v333 = vld [vmem:[%s277 + $0x1a8] sm:$0xff]
        %v334 = vld [vmem:[%s277 + $0x1b0] sm:$0xff]
        %v335 = vld [vmem:[%s277 + $0x1b8] sm:$0xff]
        %v336 = vld [vmem:[%s277 + $0x1c0] sm:$0xff]
        %v337 = vld [vmem:[%s277 + $0x1c8] sm:$0xff]
        %v338 = vld [vmem:[%s277 + $0x1d0] sm:$0xff]
        %v339 = vld [vmem:[%s277 + $0x1d8] sm:$0xff]
        %v340 = vld [vmem:[%s277 + $0x1e0] sm:$0xff]
        %v341 = vld [vmem:[%s277 + $0x1e8] sm:$0xff]
        %v342 = vld [vmem:[%s277 + $0x1f0] sm:$0xff]
        %v343 = vld [vmem:[%s277 + $0x1f8] sm:$0xff]
        %v344 = vld [vmem:[%s1] sm:$0xff]
        %v345 = vld [vmem:[%s1 + $0x8] sm:$0xff]
        %v346 = vld [vmem:[%s2] sm:$0x1]
        %v348 = vlaneseq
        %v349 = vshrl.u32 %v348, 7
        %v350 = vsub.s32 0, %v349
        %v351 = vrot.slane %v346, %v350
        %vm353 = vcmask 130048
        %v355 = vsel %vm353, %v280, 0
        %v358 = vsel %vm353, %v281, 0
        %v361 = vsel %vm353, %v282, 0
        %v364 = vsel %vm353, %v283, 0
        %v367 = vsel %vm353, %v284, 0
        %v370 = vsel %vm353, %v285, 0
        %v373 = vsel %vm353, %v286, 0
        %v376 = vsel %vm353, %v287, 0
        %v379 = vsel %vm353, %v288, 0
        %v382 = vsel %vm353, %v289, 0
        %v385 = vsel %vm353, %v290, 0
        %v388 = vsel %vm353, %v291, 0
        %v391 = vsel %vm353, %v292, 0
        %v394 = vsel %vm353, %v293, 0
        %v397 = vsel %vm353, %v294, 0
        %v400 = vsel %vm353, %v295, 0
        %v403 = vsel %vm353, %v296, 0
        %v406 = vsel %vm353, %v297, 0
        %v409 = vsel %vm353, %v298, 0
        %v412 = vsel %vm353, %v299, 0
        %v415 = vsel %vm353, %v300, 0
        %v418 = vsel %vm353, %v301, 0
        %v421 = vsel %vm353, %v302, 0
        %v424 = vsel %vm353, %v303, 0
        %v427 = vsel %vm353, %v304, 0
        %v430 = vsel %vm353, %v305, 0
        %v433 = vsel %vm353, %v306, 0
        %v436 = vsel %vm353, %v307, 0
        %v439 = vsel %vm353, %v308, 0
        %v442 = vsel %vm353, %v309, 0
        %v445 = vsel %vm353, %v310, 0
        %v448 = vsel %vm353, %v311, 0
        %v451 = vsel %vm353, %v312, 0
        %v454 = vsel %vm353, %v313, 0
        %v457 = vsel %vm353, %v314, 0
        %v460 = vsel %vm353, %v315, 0
        %v463 = vsel %vm353, %v316, 0
        %v466 = vsel %vm353, %v317, 0
        %v469 = vsel %vm353, %v318, 0
        %v472 = vsel %vm353, %v319, 0
        %v475 = vsel %vm353, %v320, 0
        %v478 = vsel %vm353, %v321, 0
        %v481 = vsel %vm353, %v322, 0
        %v484 = vsel %vm353, %v323, 0
        %v487 = vsel %vm353, %v324, 0
        %v490 = vsel %vm353, %v325, 0
        %v493 = vsel %vm353, %v326, 0
        %v496 = vsel %vm353, %v327, 0
        %v499 = vsel %vm353, %v328, 0
        %v502 = vsel %vm353, %v329, 0
        %v505 = vsel %vm353, %v330, 0
        %v508 = vsel %vm353, %v331, 0
        %v511 = vsel %vm353, %v332, 0
        %v514 = vsel %vm353, %v333, 0
        %v517 = vsel %vm353, %v334, 0
        %v520 = vsel %vm353, %v335, 0
        %v523 = vsel %vm353, %v336, 0
        %v526 = vsel %vm353, %v337, 0
        %v529 = vsel %vm353, %v338, 0
        %v532 = vsel %vm353, %v339, 0
        %v535 = vsel %vm353, %v340, 0
        %v538 = vsel %vm353, %v341, 0
        %v541 = vsel %vm353, %v342, 0
        %v544 = vsel %vm353, %v343, 0
        %546 = vmatprep.subr.mxu0 0.0
        %547 = vmatpush1.msra.mxu0 %v344
        %548 = vmatprep.subr.mxu0 0.0
        %549 = vmatpush1.msra.mxu0 %v345
        %550 = vmatprep.subr.mxu0 0.0
        %551 = vmatpush1.msra.mxu0 0.0
        %552 = vmatprep.subr.mxu0 0.0
        %553 = vmatpush1.msra.mxu0 0.0
        %554 = vmatprep.subr.mxu0 0.0
        %555 = vmatpush1.msra.mxu0 0.0
        %556 = vmatprep.subr.mxu0 0.0
        %557 = vmatpush1.msra.mxu0 0.0
        %558 = vmatprep.subr.mxu0 0.0
        %559 = vmatpush1.msra.mxu0 0.0
        %560 = vmatprep.subr.mxu0 0.0
        %561 = vmatpush1.msra.mxu0 0.0
        %562 = vmatprep.subr.mxu0 0.0
        %563 = vmatpush1.msra.mxu0 0.0
        %564 = vmatprep.subr.mxu0 0.0
        %565 = vmatpush1.msra.mxu0 0.0
        %566 = vmatprep.subr.mxu0 0.0
        %567 = vmatpush1.msra.mxu0 0.0
        %568 = vmatprep.subr.mxu0 0.0
        %569 = vmatpush1.msra.mxu0 0.0
        %570 = vmatprep.subr.mxu0 0.0
        %571 = vmatpush1.msra.mxu0 0.0
        %572 = vmatprep.subr.mxu0 0.0
        %573 = vmatpush1.msra.mxu0 0.0
        %574 = vmatprep.subr.mxu0 0.0
        %575 = vmatpush1.msra.mxu0 0.0
        %576 = vmatprep.subr.mxu0 0.0
        %577 = vmatpush1.msra.mxu0 0.0
        %578 = vmatprep.subr.mxu0 0.0
        %579 = vmatpush1.msra.mxu0 0.0
        %580 = vmatprep.subr.mxu0 0.0
        %581 = vmatpush1.msra.mxu0 0.0
        %582 = vmatprep.subr.mxu0 0.0
        %583 = vmatpush1.msra.mxu0 0.0
        %584 = vmatprep.subr.mxu0 0.0
        %585 = vmatpush1.msra.mxu0 0.0
        %586 = vmatprep.subr.mxu0 0.0
        %587 = vmatpush1.msra.mxu0 0.0
        %588 = vmatprep.subr.mxu0 0.0
        %589 = vmatpush1.msra.mxu0 0.0
        %590 = vmatprep.subr.mxu0 0.0
        %591 = vmatpush1.msra.mxu0 0.0
        %592 = vmatprep.subr.mxu0 0.0
        %593 = vmatpush1.msra.mxu0 0.0
        %594 = vmatprep.subr.mxu0 0.0
        %595 = vmatpush1.msra.mxu0 0.0
        %596 = vmatprep.subr.mxu0 0.0
        %597 = vmatpush1.msra.mxu0 0.0
        %598 = vmatprep.subr.mxu0 0.0
        %599 = vmatpush1.msra.mxu0 0.0
        %600 = vmatprep.subr.mxu0 0.0
        %601 = vmatpush1.msra.mxu0 0.0
        %602 = vmatprep.subr.mxu0 0.0
        %603 = vmatpush1.msra.mxu0 0.0
        %604 = vmatprep.subr.mxu0 0.0
        %605 = vmatpush1.msra.mxu0 0.0
        %606 = vmatprep.subr.mxu0 0.0
        %607 = vmatpush1.msra.mxu0 0.0
        %608 = vmatprep.subr.mxu0 0.0
        %609 = vmatpush1.msra.mxu0 0.0
        %610 = vmatprep.mubr.f32.mxu0 0.0
        %611 = vmatmul.mubr.f32.gmra.mrb[0].mxu0 %v355
        %v612 = vpop.f32.mrb[0].mxu0
        %v613 = vadd.f32 %v351, %v612
        %v614 = vpop.f32.mrb[0].mxu0
        %615 = vmatprep.mubr.f32.mxu0 0.0
        %616 = vmatmul.mubr.f32.gmra.mrb[0].mxu0 %v358
        %v617 = vpop.f32.mrb[0].mxu0
        %v618 = vadd.f32 %v351, %v617
        %v619 = vpop.f32.mrb[0].mxu0
        %620 = vmatprep.mubr.f32.mxu0 0.0
        %621 = vmatmul.mubr.f32.gmra.mrb[0].mxu0 %v361
        %v622 = vpop.f32.mrb[0].mxu0
        %v623 = vadd.f32 %v351, %v622
        %v624 = vpop.f32.mrb[0].mxu0
        %625 = vmatprep.mubr.f32.mxu0 0.0
        %626 = vmatmul.mubr.f32.gmra.mrb[0].mxu0 %v364
        %v627 = vpop.f32.mrb[0].mxu0
        %v628 = vadd.f32 %v351, %v627
        %v629 = vpop.f32.mrb[0].mxu0
        %630 = vmatprep.mubr.f32.mxu0 0.0
        %631 = vmatmul.mubr.f32.gmra.mrb[0].mxu0 %v367
        %v632 = vpop.f32.mrb[0].mxu0
        %v633 = vadd.f32 %v351, %v632
        %v634 = vpop.f32.mrb[0].mxu0
        %635 = vmatprep.mubr.f32.mxu0 0.0
        %636 = vmatmul.mubr.f32.gmra.mrb[0].mxu0 %v370
        %v637 = vpop.f32.mrb[0].mxu0
        %v638 = vadd.f32 %v351, %v637
        %v639 = vpop.f32.mrb[0].mxu0
        %640 = vmatprep.mubr.f32.mxu0 0.0
        %641 = vmatmul.mubr.f32.gmra.mrb[0].mxu0 %v373
        %v642 = vpop.f32.mrb[0].mxu0
        %v643 = vadd.f32 %v351, %v642
        %v644 = vpop.f32.mrb[0].mxu0
        %645 = vmatprep.mubr.f32.mxu0 0.0
        %646 = vmatmul.mubr.f32.gmra.mrb[0].mxu0 %v376
        %v647 = vpop.f32.mrb[0].mxu0
        %v648 = vadd.f32 %v351, %v647
        %v649 = vpop.f32.mrb[0].mxu0
        %650 = vmatprep.mubr.f32.mxu0 0.0
        %651 = vmatmul.mubr.f32.gmra.mrb[0].mxu0 %v379
        %v652 = vpop.f32.mrb[0].mxu0
        %v653 = vadd.f32 %v351, %v652
        %v654 = vpop.f32.mrb[0].mxu0
        %655 = vmatprep.mubr.f32.mxu0 0.0
        %656 = vmatmul.mubr.f32.gmra.mrb[0].mxu0 %v382
        %v657 = vpop.f32.mrb[0].mxu0
        %v658 = vadd.f32 %v351, %v657
        %v659 = vpop.f32.mrb[0].mxu0
        %660 = vmatprep.mubr.f32.mxu0 0.0
        %661 = vmatmul.mubr.f32.gmra.mrb[0].mxu0 %v385
        %v662 = vpop.f32.mrb[0].mxu0
        %v663 = vadd.f32 %v351, %v662
        %v664 = vpop.f32.mrb[0].mxu0
        %665 = vmatprep.mubr.f32.mxu0 0.0
        %666 = vmatmul.mubr.f32.gmra.mrb[0].mxu0 %v388
        %v667 = vpop.f32.mrb[0].mxu0
        %v668 = vadd.f32 %v351, %v667
        %v669 = vpop.f32.mrb[0].mxu0
        %670 = vmatprep.mubr.f32.mxu0 0.0
        %671 = vmatmul.mubr.f32.gmra.mrb[0].mxu0 %v391
        %v672 = vpop.f32.mrb[0].mxu0
        %v673 = vadd.f32 %v351, %v672
        %v674 = vpop.f32.mrb[0].mxu0
        %675 = vmatprep.mubr.f32.mxu0 0.0
        %676 = vmatmul.mubr.f32.gmra.mrb[0].mxu0 %v394
        %v677 = vpop.f32.mrb[0].mxu0
        %v678 = vadd.f32 %v351, %v677
        %v679 = vpop.f32.mrb[0].mxu0
        %680 = vmatprep.mubr.f32.mxu0 0.0
        %681 = vmatmul.mubr.f32.gmra.mrb[0].mxu0 %v397
        %v682 = vpop.f32.mrb[0].mxu0
        %v683 = vadd.f32 %v351, %v682
        %v684 = vpop.f32.mrb[0].mxu0
        %685 = vmatprep.mubr.f32.mxu0 0.0
        %686 = vmatmul.mubr.f32.gmra.mrb[0].mxu0 %v400
        %v687 = vpop.f32.mrb[0].mxu0
        %v688 = vadd.f32 %v351, %v687
        %v689 = vpop.f32.mrb[0].mxu0
        %690 = vmatprep.mubr.f32.mxu0 0.0
        %691 = vmatmul.mubr.f32.gmra.mrb[0].mxu0 %v403
        %v692 = vpop.f32.mrb[0].mxu0
        %v693 = vadd.f32 %v351, %v692
        %v694 = vpop.f32.mrb[0].mxu0
        %695 = vmatprep.mubr.f32.mxu0 0.0
        %696 = vmatmul.mubr.f32.gmra.mrb[0].mxu0 %v406
        %v697 = vpop.f32.mrb[0].mxu0
        %v698 = vadd.f32 %v351, %v697
        %v699 = vpop.f32.mrb[0].mxu0
        %700 = vmatprep.mubr.f32.mxu0 0.0
        %701 = vmatmul.mubr.f32.gmra.mrb[0].mxu0 %v409
        %v702 = vpop.f32.mrb[0].mxu0
        %v703 = vadd.f32 %v351, %v702
        %v704 = vpop.f32.mrb[0].mxu0
        %705 = vmatprep.mubr.f32.mxu0 0.0
        %706 = vmatmul.mubr.f32.gmra.mrb[0].mxu0 %v412
        %v707 = vpop.f32.mrb[0].mxu0
        %v708 = vadd.f32 %v351, %v707
        %v709 = vpop.f32.mrb[0].mxu0
        %710 = vmatprep.mubr.f32.mxu0 0.0
        %711 = vmatmul.mubr.f32.gmra.mrb[0].mxu0 %v415
        %v712 = vpop.f32.mrb[0].mxu0
        %v713 = vadd.f32 %v351, %v712
        %v714 = vpop.f32.mrb[0].mxu0
        %715 = vmatprep.mubr.f32.mxu0 0.0
        %716 = vmatmul.mubr.f32.gmra.mrb[0].mxu0 %v418
        %v717 = vpop.f32.mrb[0].mxu0
        %v718 = vadd.f32 %v351, %v717
        %v719 = vpop.f32.mrb[0].mxu0
        %720 = vmatprep.mubr.f32.mxu0 0.0
        %721 = vmatmul.mubr.f32.gmra.mrb[0].mxu0 %v421
        %v722 = vpop.f32.mrb[0].mxu0
        %v723 = vadd.f32 %v351, %v722
        %v724 = vpop.f32.mrb[0].mxu0
        %725 = vmatprep.mubr.f32.mxu0 0.0
        %726 = vmatmul.mubr.f32.gmra.mrb[0].mxu0 %v424
        %v727 = vpop.f32.mrb[0].mxu0
        %v728 = vadd.f32 %v351, %v727
        %v729 = vpop.f32.mrb[0].mxu0
        %730 = vmatprep.mubr.f32.mxu0 0.0
        %731 = vmatmul.mubr.f32.gmra.mrb[0].mxu0 %v427
        %v732 = vpop.f32.mrb[0].mxu0
        %v733 = vadd.f32 %v351, %v732
        %v734 = vpop.f32.mrb[0].mxu0
        %735 = vmatprep.mubr.f32.mxu0 0.0
        %736 = vmatmul.mubr.f32.gmra.mrb[0].mxu0 %v430
        %v737 = vpop.f32.mrb[0].mxu0
        %v738 = vadd.f32 %v351, %v737
        %v739 = vpop.f32.mrb[0].mxu0
        %740 = vmatprep.mubr.f32.mxu0 0.0
        %741 = vmatmul.mubr.f32.gmra.mrb[0].mxu0 %v433
        %v742 = vpop.f32.mrb[0].mxu0
        %v743 = vadd.f32 %v351, %v742
        %v744 = vpop.f32.mrb[0].mxu0
        %745 = vmatprep.mubr.f32.mxu0 0.0
        %746 = vmatmul.mubr.f32.gmra.mrb[0].mxu0 %v436
        %v747 = vpop.f32.mrb[0].mxu0
        %v748 = vadd.f32 %v351, %v747
        %v749 = vpop.f32.mrb[0].mxu0
        %750 = vmatprep.mubr.f32.mxu0 0.0
        %751 = vmatmul.mubr.f32.gmra.mrb[0].mxu0 %v439
        %v752 = vpop.f32.mrb[0].mxu0
        %v753 = vadd.f32 %v351, %v752
        %v754 = vpop.f32.mrb[0].mxu0
        %755 = vmatprep.mubr.f32.mxu0 0.0
        %756 = vmatmul.mubr.f32.gmra.mrb[0].mxu0 %v442
        %v757 = vpop.f32.mrb[0].mxu0
        %v758 = vadd.f32 %v351, %v757
        %v759 = vpop.f32.mrb[0].mxu0
        %760 = vmatprep.mubr.f32.mxu0 0.0
        %761 = vmatmul.mubr.f32.gmra.mrb[0].mxu0 %v445
        %v762 = vpop.f32.mrb[0].mxu0
        %v763 = vadd.f32 %v351, %v762
        %v764 = vpop.f32.mrb[0].mxu0
        %765 = vmatprep.mubr.f32.mxu0 0.0
        %766 = vmatmul.mubr.f32.gmra.mrb[0].mxu0 %v448
        %v767 = vpop.f32.mrb[0].mxu0
        %v768 = vadd.f32 %v351, %v767
        %v769 = vpop.f32.mrb[0].mxu0
        %770 = vmatprep.mubr.f32.mxu0 0.0
        %771 = vmatmul.mubr.f32.gmra.mrb[0].mxu0 %v451
        %v772 = vpop.f32.mrb[0].mxu0
        %v773 = vadd.f32 %v351, %v772
        %v774 = vpop.f32.mrb[0].mxu0
        %775 = vmatprep.mubr.f32.mxu0 0.0
        %776 = vmatmul.mubr.f32.gmra.mrb[0].mxu0 %v454
        %v777 = vpop.f32.mrb[0].mxu0
        %v778 = vadd.f32 %v351, %v777
        %v779 = vpop.f32.mrb[0].mxu0
        %780 = vmatprep.mubr.f32.mxu0 0.0
        %781 = vmatmul.mubr.f32.gmra.mrb[0].mxu0 %v457
        %v782 = vpop.f32.mrb[0].mxu0
        %v783 = vadd.f32 %v351, %v782
        %v784 = vpop.f32.mrb[0].mxu0
        %785 = vmatprep.mubr.f32.mxu0 0.0
        %786 = vmatmul.mubr.f32.gmra.mrb[0].mxu0 %v460
        %v787 = vpop.f32.mrb[0].mxu0
        %v788 = vadd.f32 %v351, %v787
        %v789 = vpop.f32.mrb[0].mxu0
        %790 = vmatprep.mubr.f32.mxu0 0.0
        %791 = vmatmul.mubr.f32.gmra.mrb[0].mxu0 %v463
        %v792 = vpop.f32.mrb[0].mxu0
        %v793 = vadd.f32 %v351, %v792
        %v794 = vpop.f32.mrb[0].mxu0
        %795 = vmatprep.mubr.f32.mxu0 0.0
        %796 = vmatmul.mubr.f32.gmra.mrb[0].mxu0 %v466
        %v797 = vpop.f32.mrb[0].mxu0
        %v798 = vadd.f32 %v351, %v797
        %v799 = vpop.f32.mrb[0].mxu0
        %800 = vmatprep.mubr.f32.mxu0 0.0
        %801 = vmatmul.mubr.f32.gmra.mrb[0].mxu0 %v469
        %v802 = vpop.f32.mrb[0].mxu0
        %v803 = vadd.f32 %v351, %v802
        %v804 = vpop.f32.mrb[0].mxu0
        %805 = vmatprep.mubr.f32.mxu0 0.0
        %806 = vmatmul.mubr.f32.gmra.mrb[0].mxu0 %v472
        %v807 = vpop.f32.mrb[0].mxu0
        %v808 = vadd.f32 %v351, %v807
        %v809 = vpop.f32.mrb[0].mxu0
        %810 = vmatprep.mubr.f32.mxu0 0.0
        %811 = vmatmul.mubr.f32.gmra.mrb[0].mxu0 %v475
        %v812 = vpop.f32.mrb[0].mxu0
        %v813 = vadd.f32 %v351, %v812
        %v814 = vpop.f32.mrb[0].mxu0
        %815 = vmatprep.mubr.f32.mxu0 0.0
        %816 = vmatmul.mubr.f32.gmra.mrb[0].mxu0 %v478
        %v817 = vpop.f32.mrb[0].mxu0
        %v818 = vadd.f32 %v351, %v817
        %v819 = vpop.f32.mrb[0].mxu0
        %820 = vmatprep.mubr.f32.mxu0 0.0
        %821 = vmatmul.mubr.f32.gmra.mrb[0].mxu0 %v481
        %v822 = vpop.f32.mrb[0].mxu0
        %v823 = vadd.f32 %v351, %v822
        %v824 = vpop.f32.mrb[0].mxu0
        %825 = vmatprep.mubr.f32.mxu0 0.0
        %826 = vmatmul.mubr.f32.gmra.mrb[0].mxu0 %v484
        %v827 = vpop.f32.mrb[0].mxu0
        %v828 = vadd.f32 %v351, %v827
        %v829 = vpop.f32.mrb[0].mxu0
        %830 = vmatprep.mubr.f32.mxu0 0.0
        %831 = vmatmul.mubr.f32.gmra.mrb[0].mxu0 %v487
        %v832 = vpop.f32.mrb[0].mxu0
        %v833 = vadd.f32 %v351, %v832
        %v834 = vpop.f32.mrb[0].mxu0
        %835 = vmatprep.mubr.f32.mxu0 0.0
        %836 = vmatmul.mubr.f32.gmra.mrb[0].mxu0 %v490
        %v837 = vpop.f32.mrb[0].mxu0
        %v838 = vadd.f32 %v351, %v837
        %v839 = vpop.f32.mrb[0].mxu0
        %840 = vmatprep.mubr.f32.mxu0 0.0
        %841 = vmatmul.mubr.f32.gmra.mrb[0].mxu0 %v493
        %v842 = vpop.f32.mrb[0].mxu0
        %v843 = vadd.f32 %v351, %v842
        %v844 = vpop.f32.mrb[0].mxu0
        %845 = vmatprep.mubr.f32.mxu0 0.0
        %846 = vmatmul.mubr.f32.gmra.mrb[0].mxu0 %v496
        %v847 = vpop.f32.mrb[0].mxu0
        %v848 = vadd.f32 %v351, %v847
        %v849 = vpop.f32.mrb[0].mxu0
        %850 = vmatprep.mubr.f32.mxu0 0.0
        %851 = vmatmul.mubr.f32.gmra.mrb[0].mxu0 %v499
        %v852 = vpop.f32.mrb[0].mxu0
        %v853 = vadd.f32 %v351, %v852
        %v854 = vpop.f32.mrb[0].mxu0
        %855 = vmatprep.mubr.f32.mxu0 0.0
        %856 = vmatmul.mubr.f32.gmra.mrb[0].mxu0 %v502
        %v857 = vpop.f32.mrb[0].mxu0
        %v858 = vadd.f32 %v351, %v857
        %v859 = vpop.f32.mrb[0].mxu0
        %860 = vmatprep.mubr.f32.mxu0 0.0
        %861 = vmatmul.mubr.f32.gmra.mrb[0].mxu0 %v505
        %v862 = vpop.f32.mrb[0].mxu0
        %v863 = vadd.f32 %v351, %v862
        %v864 = vpop.f32.mrb[0].mxu0
        %865 = vmatprep.mubr.f32.mxu0 0.0
        %866 = vmatmul.mubr.f32.gmra.mrb[0].mxu0 %v508
        %v867 = vpop.f32.mrb[0].mxu0
        %v868 = vadd.f32 %v351, %v867
        %v869 = vpop.f32.mrb[0].mxu0
        %870 = vmatprep.mubr.f32.mxu0 0.0
        %871 = vmatmul.mubr.f32.gmra.mrb[0].mxu0 %v511
        %v872 = vpop.f32.mrb[0].mxu0
        %v873 = vadd.f32 %v351, %v872
        %v874 = vpop.f32.mrb[0].mxu0
        %875 = vmatprep.mubr.f32.mxu0 0.0
        %876 = vmatmul.mubr.f32.gmra.mrb[0].mxu0 %v514
        %v877 = vpop.f32.mrb[0].mxu0
        %v878 = vadd.f32 %v351, %v877
        %v879 = vpop.f32.mrb[0].mxu0
        %880 = vmatprep.mubr.f32.mxu0 0.0
        %881 = vmatmul.mubr.f32.gmra.mrb[0].mxu0 %v517
        %v882 = vpop.f32.mrb[0].mxu0
        %v883 = vadd.f32 %v351, %v882
        %v884 = vpop.f32.mrb[0].mxu0
        %885 = vmatprep.mubr.f32.mxu0 0.0
        %886 = vmatmul.mubr.f32.gmra.mrb[0].mxu0 %v520
        %v887 = vpop.f32.mrb[0].mxu0
        %v888 = vadd.f32 %v351, %v887
        %v889 = vpop.f32.mrb[0].mxu0
        %890 = vmatprep.mubr.f32.mxu0 0.0
        %891 = vmatmul.mubr.f32.gmra.mrb[0].mxu0 %v523
        %v892 = vpop.f32.mrb[0].mxu0
        %v893 = vadd.f32 %v351, %v892
        %v894 = vpop.f32.mrb[0].mxu0
        %895 = vmatprep.mubr.f32.mxu0 0.0
        %896 = vmatmul.mubr.f32.gmra.mrb[0].mxu0 %v526
        %v897 = vpop.f32.mrb[0].mxu0
        %v898 = vadd.f32 %v351, %v897
        %v899 = vpop.f32.mrb[0].mxu0
        %900 = vmatprep.mubr.f32.mxu0 0.0
        %901 = vmatmul.mubr.f32.gmra.mrb[0].mxu0 %v529
        %v902 = vpop.f32.mrb[0].mxu0
        %v903 = vadd.f32 %v351, %v902
        %v904 = vpop.f32.mrb[0].mxu0
        %905 = vmatprep.mubr.f32.mxu0 0.0
        %906 = vmatmul.mubr.f32.gmra.mrb[0].mxu0 %v532
        %v907 = vpop.f32.mrb[0].mxu0
        %v908 = vadd.f32 %v351, %v907
        %v909 = vpop.f32.mrb[0].mxu0
        %910 = vmatprep.mubr.f32.mxu0 0.0
        %911 = vmatmul.mubr.f32.gmra.mrb[0].mxu0 %v535
        %v912 = vpop.f32.mrb[0].mxu0
        %v913 = vadd.f32 %v351, %v912
        %v914 = vpop.f32.mrb[0].mxu0
        %915 = vmatprep.mubr.f32.mxu0 0.0
        %916 = vmatmul.mubr.f32.gmra.mrb[0].mxu0 %v538
        %v917 = vpop.f32.mrb[0].mxu0
        %v918 = vadd.f32 %v351, %v917
        %v919 = vpop.f32.mrb[0].mxu0
        %920 = vmatprep.mubr.f32.mxu0 0.0
        %921 = vmatmul.mubr.f32.gmra.mrb[0].mxu0 %v541
        %v922 = vpop.f32.mrb[0].mxu0
        %v923 = vadd.f32 %v351, %v922
        %v924 = vpop.f32.mrb[0].mxu0
        %925 = vmatprep.mubr.f32.mxu0 0.0
        %926 = vmatmul.mubr.f32.gmra.mrb[0].mxu0 %v544
        %v927 = vpop.f32.mrb[0].mxu0
        %v928 = vadd.f32 %v351, %v927
        %v929 = vpop.f32.mrb[0].mxu0
        %930 = vdwg.mxu0
        %v931 = vtanh.pop %v613
        %v932 = vtanh.pop %v618
        %v933 = vtanh.pop %v623
        %v934 = vtanh.pop %v628
        %v935 = vtanh.pop %v633
        %v936 = vtanh.pop %v638
        %v937 = vtanh.pop %v643
        %v938 = vtanh.pop %v648
        %v939 = vtanh.pop %v653
        %v940 = vtanh.pop %v658
        %v941 = vtanh.pop %v663
        %v942 = vtanh.pop %v668
        %v943 = vtanh.pop %v673
        %v944 = vtanh.pop %v678
        %v945 = vtanh.pop %v683
        %v946 = vtanh.pop %v688
        %v947 = vtanh.pop %v693
        %v948 = vtanh.pop %v698
        %v949 = vtanh.pop %v703
        %v950 = vtanh.pop %v708
        %v951 = vtanh.pop %v713
        %v952 = vtanh.pop %v718
        %v953 = vtanh.pop %v723
        %v954 = vtanh.pop %v728
        %v955 = vtanh.pop %v733
        %v956 = vtanh.pop %v738
        %v957 = vtanh.pop %v743
        %v958 = vtanh.pop %v748
        %v959 = vtanh.pop %v753
        %v960 = vtanh.pop %v758
        %v961 = vtanh.pop %v763
        %v962 = vtanh.pop %v768
        %v963 = vtanh.pop %v773
        %v964 = vtanh.pop %v778
        %v965 = vtanh.pop %v783
        %v966 = vtanh.pop %v788
        %v967 = vtanh.pop %v793
        %v968 = vtanh.pop %v798
        %v969 = vtanh.pop %v803
        %v970 = vtanh.pop %v808
        %v971 = vtanh.pop %v813
        %v972 = vtanh.pop %v818
        %v973 = vtanh.pop %v823
        %v974 = vtanh.pop %v828
        %v975 = vtanh.pop %v833
        %v976 = vtanh.pop %v838
        %v977 = vtanh.pop %v843
        %v978 = vtanh.pop %v848
        %v979 = vtanh.pop %v853
        %v980 = vtanh.pop %v858
        %v981 = vtanh.pop %v863
        %v982 = vtanh.pop %v868
        %v983 = vtanh.pop %v873
        %v984 = vtanh.pop %v878
        %v985 = vtanh.pop %v883
        %v986 = vtanh.pop %v888
        %v987 = vtanh.pop %v893
        %v988 = vtanh.pop %v898
        %v989 = vtanh.pop %v903
        %v990 = vtanh.pop %v908
        %v991 = vtanh.pop %v913
        %v992 = vtanh.pop %v918
        %v993 = vtanh.pop %v923
        %v994 = vtanh.pop %v928
        %v995 = vld [vmem:[%s3] sm:$0xff]
        %v996 = vld [vmem:[%s3 + $0x8] sm:$0xff]
        %v997 = vld [vmem:[%s3 + $0x10] sm:$0xff]
        %v998 = vld [vmem:[%s3 + $0x18] sm:$0xff]
        %v999 = vld [vmem:[%s3 + $0x20] sm:$0xff]
        %v1000 = vld [vmem:[%s3 + $0x28] sm:$0xff]
        %v1001 = vld [vmem:[%s3 + $0x30] sm:$0xff]
        %v1002 = vld [vmem:[%s3 + $0x38] sm:$0xff]
        %v1003 = vld [vmem:[%s4] sm:$0x1]
        %v1005 = vlaneseq
        %v1006 = vshrl.u32 %v1005, 7
        %v1007 = vsub.s32 0, %v1006
        %v1008 = vrot.slane %v1003, %v1007
        %vm1010 = vcmask 523264
        %v1012 = vsel %vm1010, %v931, 0
        %v1015 = vsel %vm1010, %v932, 0
        %v1018 = vsel %vm1010, %v933, 0
        %v1021 = vsel %vm1010, %v934, 0
        %v1024 = vsel %vm1010, %v935, 0
        %v1027 = vsel %vm1010, %v936, 0
        %v1030 = vsel %vm1010, %v937, 0
        %v1033 = vsel %vm1010, %v938, 0
        %v1036 = vsel %vm1010, %v939, 0
        %v1039 = vsel %vm1010, %v940, 0
        %v1042 = vsel %vm1010, %v941, 0
        %v1045 = vsel %vm1010, %v942, 0
        %v1048 = vsel %vm1010, %v943, 0
        %v1051 = vsel %vm1010, %v944, 0
        %v1054 = vsel %vm1010, %v945, 0
        %v1057 = vsel %vm1010, %v946, 0
        %v1060 = vsel %vm1010, %v947, 0
        %v1063 = vsel %vm1010, %v948, 0
        %v1066 = vsel %vm1010, %v949, 0
        %v1069 = vsel %vm1010, %v950, 0
        %v1072 = vsel %vm1010, %v951, 0
        %v1075 = vsel %vm1010, %v952, 0
        %v1078 = vsel %vm1010, %v953, 0
        %v1081 = vsel %vm1010, %v954, 0
        %v1084 = vsel %vm1010, %v955, 0
        %v1087 = vsel %vm1010, %v956, 0
        %v1090 = vsel %vm1010, %v957, 0
        %v1093 = vsel %vm1010, %v958, 0
        %v1096 = vsel %vm1010, %v959, 0
        %v1099 = vsel %vm1010, %v960, 0
        %v1102 = vsel %vm1010, %v961, 0
        %v1105 = vsel %vm1010, %v962, 0
        %v1108 = vsel %vm1010, %v963, 0
        %v1111 = vsel %vm1010, %v964, 0
        %v1114 = vsel %vm1010, %v965, 0
        %v1117 = vsel %vm1010, %v966, 0
        %v1120 = vsel %vm1010, %v967, 0
        %v1123 = vsel %vm1010, %v968, 0
        %v1126 = vsel %vm1010, %v969, 0
        %v1129 = vsel %vm1010, %v970, 0
        %v1132 = vsel %vm1010, %v971, 0
        %v1135 = vsel %vm1010, %v972, 0
        %v1138 = vsel %vm1010, %v973, 0
        %v1141 = vsel %vm1010, %v974, 0
        %v1144 = vsel %vm1010, %v975, 0
        %v1147 = vsel %vm1010, %v976, 0
        %v1150 = vsel %vm1010, %v977, 0
        %v1153 = vsel %vm1010, %v978, 0
        %v1156 = vsel %vm1010, %v979, 0
        %v1159 = vsel %vm1010, %v980, 0
        %v1162 = vsel %vm1010, %v981, 0
        %v1165 = vsel %vm1010, %v982, 0
        %v1168 = vsel %vm1010, %v983, 0
        %v1171 = vsel %vm1010, %v984, 0
        %v1174 = vsel %vm1010, %v985, 0
        %v1177 = vsel %vm1010, %v986, 0
        %v1180 = vsel %vm1010, %v987, 0
        %v1183 = vsel %vm1010, %v988, 0
        %v1186 = vsel %vm1010, %v989, 0
        %v1189 = vsel %vm1010, %v990, 0
        %v1192 = vsel %vm1010, %v991, 0
        %v1195 = vsel %vm1010, %v992, 0
        %v1198 = vsel %vm1010, %v993, 0
        %v1201 = vsel %vm1010, %v994, 0
        %1203 = vmatprep.subr.mxu0 0.0
        %1204 = vmatpush1.msra.mxu0 %v995
        %1205 = vmatprep.subr.mxu0 0.0
        %1206 = vmatpush1.msra.mxu0 %v996
        %1207 = vmatprep.subr.mxu0 0.0
        %1208 = vmatpush1.msra.mxu0 %v997
        %1209 = vmatprep.subr.mxu0 0.0
        %1210 = vmatpush1.msra.mxu0 %v998
        %1211 = vmatprep.subr.mxu0 0.0
        %1212 = vmatpush1.msra.mxu0 %v999
        %1213 = vmatprep.subr.mxu0 0.0
        %1214 = vmatpush1.msra.mxu0 %v1000
        %1215 = vmatprep.subr.mxu0 0.0
        %1216 = vmatpush1.msra.mxu0 %v1001
        %1217 = vmatprep.subr.mxu0 0.0
        %1218 = vmatpush1.msra.mxu0 %v1002
        %1219 = vmatprep.subr.mxu0 0.0
        %1220 = vmatpush1.msra.mxu0 0.0
        %1221 = vmatprep.subr.mxu0 0.0
        %1222 = vmatpush1.msra.mxu0 0.0
        %1223 = vmatprep.subr.mxu0 0.0
        %1224 = vmatpush1.msra.mxu0 0.0
        %1225 = vmatprep.subr.mxu0 0.0
        %1226 = vmatpush1.msra.mxu0 0.0
        %1227 = vmatprep.subr.mxu0 0.0
        %1228 = vmatpush1.msra.mxu0 0.0
        %1229 = vmatprep.subr.mxu0 0.0
        %1230 = vmatpush1.msra.mxu0 0.0
        %1231 = vmatprep.subr.mxu0 0.0
        %1232 = vmatpush1.msra.mxu0 0.0
        %1233 = vmatprep.subr.mxu0 0.0
        %1234 = vmatpush1.msra.mxu0 0.0
        %1235 = vmatprep.subr.mxu0 0.0
        %1236 = vmatpush1.msra.mxu0 0.0
        %1237 = vmatprep.subr.mxu0 0.0
        %1238 = vmatpush1.msra.mxu0 0.0
        %1239 = vmatprep.subr.mxu0 0.0
        %1240 = vmatpush1.msra.mxu0 0.0
        %1241 = vmatprep.subr.mxu0 0.0
        %1242 = vmatpush1.msra.mxu0 0.0
        %1243 = vmatprep.subr.mxu0 0.0
        %1244 = vmatpush1.msra.mxu0 0.0
        %1245 = vmatprep.subr.mxu0 0.0
        %1246 = vmatpush1.msra.mxu0 0.0
        %1247 = vmatprep.subr.mxu0 0.0
        %1248 = vmatpush1.msra.mxu0 0.0
        %1249 = vmatprep.subr.mxu0 0.0
        %1250 = vmatpush1.msra.mxu0 0.0
        %1251 = vmatprep.subr.mxu0 0.0
        %1252 = vmatpush1.msra.mxu0 0.0
        %1253 = vmatprep.subr.mxu0 0.0
        %1254 = vmatpush1.msra.mxu0 0.0
        %1255 = vmatprep.subr.mxu0 0.0
        %1256 = vmatpush1.msra.mxu0 0.0
        %1257 = vmatprep.subr.mxu0 0.0
        %1258 = vmatpush1.msra.mxu0 0.0
        %1259 = vmatprep.subr.mxu0 0.0
        %1260 = vmatpush1.msra.mxu0 0.0
        %1261 = vmatprep.subr.mxu0 0.0
        %1262 = vmatpush1.msra.mxu0 0.0
        %1263 = vmatprep.subr.mxu0 0.0
        %1264 = vmatpush1.msra.mxu0 0.0
        %1265 = vmatprep.subr.mxu0 0.0
        %1266 = vmatpush1.msra.mxu0 0.0
        %1267 = vmatprep.mubr.f32.mxu0 0.0
        %1268 = vmatmul.mubr.f32.gmra.mrb[0].mxu0 %v1012
        %v1269 = vpop.f32.mrb[0].mxu0
        %v1270 = vadd.f32 %v1008, %v1269
        %v1271 = vpop.f32.mrb[0].mxu0
        %1272 = vmatprep.mubr.f32.mxu0 0.0
        %1273 = vmatmul.mubr.f32.gmra.mrb[0].mxu0 %v1015
        %v1274 = vpop.f32.mrb[0].mxu0
        %v1275 = vadd.f32 %v1008, %v1274
        %v1276 = vpop.f32.mrb[0].mxu0
        %1277 = vmatprep.mubr.f32.mxu0 0.0
        %1278 = vmatmul.mubr.f32.gmra.mrb[0].mxu0 %v1018
        %v1279 = vpop.f32.mrb[0].mxu0
        %v1280 = vadd.f32 %v1008, %v1279
        %v1281 = vpop.f32.mrb[0].mxu0
        %1282 = vmatprep.mubr.f32.mxu0 0.0
        %1283 = vmatmul.mubr.f32.gmra.mrb[0].mxu0 %v1021
        %v1284 = vpop.f32.mrb[0].mxu0
        %v1285 = vadd.f32 %v1008, %v1284
        %v1286 = vpop.f32.mrb[0].mxu0
        %1287 = vmatprep.mubr.f32.mxu0 0.0
        %1288 = vmatmul.mubr.f32.gmra.mrb[0].mxu0 %v1024
        %v1289 = vpop.f32.mrb[0].mxu0
        %v1290 = vadd.f32 %v1008, %v1289
        %v1291 = vpop.f32.mrb[0].mxu0
        %1292 = vmatprep.mubr.f32.mxu0 0.0
        %1293 = vmatmul.mubr.f32.gmra.mrb[0].mxu0 %v1027
        %v1294 = vpop.f32.mrb[0].mxu0
        %v1295 = vadd.f32 %v1008, %v1294
        %v1296 = vpop.f32.mrb[0].mxu0
        %1297 = vmatprep.mubr.f32.mxu0 0.0
        %1298 = vmatmul.mubr.f32.gmra.mrb[0].mxu0 %v1030
        %v1299 = vpop.f32.mrb[0].mxu0
        %v1300 = vadd.f32 %v1008, %v1299
        %v1301 = vpop.f32.mrb[0].mxu0
        %1302 = vmatprep.mubr.f32.mxu0 0.0
        %1303 = vmatmul.mubr.f32.gmra.mrb[0].mxu0 %v1033
        %v1304 = vpop.f32.mrb[0].mxu0
        %v1305 = vadd.f32 %v1008, %v1304
        %v1306 = vpop.f32.mrb[0].mxu0
        %1307 = vmatprep.mubr.f32.mxu0 0.0
        %1308 = vmatmul.mubr.f32.gmra.mrb[0].mxu0 %v1036
        %v1309 = vpop.f32.mrb[0].mxu0
        %v1310 = vadd.f32 %v1008, %v1309
        %v1311 = vpop.f32.mrb[0].mxu0
        %1312 = vmatprep.mubr.f32.mxu0 0.0
        %1313 = vmatmul.mubr.f32.gmra.mrb[0].mxu0 %v1039
        %v1314 = vpop.f32.mrb[0].mxu0
        %v1315 = vadd.f32 %v1008, %v1314
        %v1316 = vpop.f32.mrb[0].mxu0
        %1317 = vmatprep.mubr.f32.mxu0 0.0
        %1318 = vmatmul.mubr.f32.gmra.mrb[0].mxu0 %v1042
        %v1319 = vpop.f32.mrb[0].mxu0
        %v1320 = vadd.f32 %v1008, %v1319
        %v1321 = vpop.f32.mrb[0].mxu0
        %1322 = vmatprep.mubr.f32.mxu0 0.0
        %1323 = vmatmul.mubr.f32.gmra.mrb[0].mxu0 %v1045
        %v1324 = vpop.f32.mrb[0].mxu0
        %v1325 = vadd.f32 %v1008, %v1324
        %v1326 = vpop.f32.mrb[0].mxu0
        %1327 = vmatprep.mubr.f32.mxu0 0.0
        %1328 = vmatmul.mubr.f32.gmra.mrb[0].mxu0 %v1048
        %v1329 = vpop.f32.mrb[0].mxu0
        %v1330 = vadd.f32 %v1008, %v1329
        %v1331 = vpop.f32.mrb[0].mxu0
        %1332 = vmatprep.mubr.f32.mxu0 0.0
        %1333 = vmatmul.mubr.f32.gmra.mrb[0].mxu0 %v1051
        %v1334 = vpop.f32.mrb[0].mxu0
        %v1335 = vadd.f32 %v1008, %v1334
        %v1336 = vpop.f32.mrb[0].mxu0
        %1337 = vmatprep.mubr.f32.mxu0 0.0
        %1338 = vmatmul.mubr.f32.gmra.mrb[0].mxu0 %v1054
        %v1339 = vpop.f32.mrb[0].mxu0
        %v1340 = vadd.f32 %v1008, %v1339
        %v1341 = vpop.f32.mrb[0].mxu0
        %1342 = vmatprep.mubr.f32.mxu0 0.0
        %1343 = vmatmul.mubr.f32.gmra.mrb[0].mxu0 %v1057
        %v1344 = vpop.f32.mrb[0].mxu0
        %v1345 = vadd.f32 %v1008, %v1344
        %v1346 = vpop.f32.mrb[0].mxu0
        %1347 = vmatprep.mubr.f32.mxu0 0.0
        %1348 = vmatmul.mubr.f32.gmra.mrb[0].mxu0 %v1060
        %v1349 = vpop.f32.mrb[0].mxu0
        %v1350 = vadd.f32 %v1008, %v1349
        %v1351 = vpop.f32.mrb[0].mxu0
        %1352 = vmatprep.mubr.f32.mxu0 0.0
        %1353 = vmatmul.mubr.f32.gmra.mrb[0].mxu0 %v1063
        %v1354 = vpop.f32.mrb[0].mxu0
        %v1355 = vadd.f32 %v1008, %v1354
        %v1356 = vpop.f32.mrb[0].mxu0
        %1357 = vmatprep.mubr.f32.mxu0 0.0
        %1358 = vmatmul.mubr.f32.gmra.mrb[0].mxu0 %v1066
        %v1359 = vpop.f32.mrb[0].mxu0
        %v1360 = vadd.f32 %v1008, %v1359
        %v1361 = vpop.f32.mrb[0].mxu0
        %1362 = vmatprep.mubr.f32.mxu0 0.0
        %1363 = vmatmul.mubr.f32.gmra.mrb[0].mxu0 %v1069
        %v1364 = vpop.f32.mrb[0].mxu0
        %v1365 = vadd.f32 %v1008, %v1364
        %v1366 = vpop.f32.mrb[0].mxu0
        %1367 = vmatprep.mubr.f32.mxu0 0.0
        %1368 = vmatmul.mubr.f32.gmra.mrb[0].mxu0 %v1072
        %v1369 = vpop.f32.mrb[0].mxu0
        %v1370 = vadd.f32 %v1008, %v1369
        %v1371 = vpop.f32.mrb[0].mxu0
        %1372 = vmatprep.mubr.f32.mxu0 0.0
        %1373 = vmatmul.mubr.f32.gmra.mrb[0].mxu0 %v1075
        %v1374 = vpop.f32.mrb[0].mxu0
        %v1375 = vadd.f32 %v1008, %v1374
        %v1376 = vpop.f32.mrb[0].mxu0
        %1377 = vmatprep.mubr.f32.mxu0 0.0
        %1378 = vmatmul.mubr.f32.gmra.mrb[0].mxu0 %v1078
        %v1379 = vpop.f32.mrb[0].mxu0
        %v1380 = vadd.f32 %v1008, %v1379
        %v1381 = vpop.f32.mrb[0].mxu0
        %1382 = vmatprep.mubr.f32.mxu0 0.0
        %1383 = vmatmul.mubr.f32.gmra.mrb[0].mxu0 %v1081
        %v1384 = vpop.f32.mrb[0].mxu0
        %v1385 = vadd.f32 %v1008, %v1384
        %v1386 = vpop.f32.mrb[0].mxu0
        %1387 = vmatprep.mubr.f32.mxu0 0.0
        %1388 = vmatmul.mubr.f32.gmra.mrb[0].mxu0 %v1084
        %v1389 = vpop.f32.mrb[0].mxu0
        %v1390 = vadd.f32 %v1008, %v1389
        %v1391 = vpop.f32.mrb[0].mxu0
        %1392 = vmatprep.mubr.f32.mxu0 0.0
        %1393 = vmatmul.mubr.f32.gmra.mrb[0].mxu0 %v1087
        %v1394 = vpop.f32.mrb[0].mxu0
        %v1395 = vadd.f32 %v1008, %v1394
        %v1396 = vpop.f32.mrb[0].mxu0
        %1397 = vmatprep.mubr.f32.mxu0 0.0
        %1398 = vmatmul.mubr.f32.gmra.mrb[0].mxu0 %v1090
        %v1399 = vpop.f32.mrb[0].mxu0
        %v1400 = vadd.f32 %v1008, %v1399
        %v1401 = vpop.f32.mrb[0].mxu0
        %1402 = vmatprep.mubr.f32.mxu0 0.0
        %1403 = vmatmul.mubr.f32.gmra.mrb[0].mxu0 %v1093
        %v1404 = vpop.f32.mrb[0].mxu0
        %v1405 = vadd.f32 %v1008, %v1404
        %v1406 = vpop.f32.mrb[0].mxu0
        %1407 = vmatprep.mubr.f32.mxu0 0.0
        %1408 = vmatmul.mubr.f32.gmra.mrb[0].mxu0 %v1096
        %v1409 = vpop.f32.mrb[0].mxu0
        %v1410 = vadd.f32 %v1008, %v1409
        %v1411 = vpop.f32.mrb[0].mxu0
        %1412 = vmatprep.mubr.f32.mxu0 0.0
        %1413 = vmatmul.mubr.f32.gmra.mrb[0].mxu0 %v1099
        %v1414 = vpop.f32.mrb[0].mxu0
        %v1415 = vadd.f32 %v1008, %v1414
        %v1416 = vpop.f32.mrb[0].mxu0
        %1417 = vmatprep.mubr.f32.mxu0 0.0
        %1418 = vmatmul.mubr.f32.gmra.mrb[0].mxu0 %v1102
        %v1419 = vpop.f32.mrb[0].mxu0
        %v1420 = vadd.f32 %v1008, %v1419
        %v1421 = vpop.f32.mrb[0].mxu0
        %1422 = vmatprep.mubr.f32.mxu0 0.0
        %1423 = vmatmul.mubr.f32.gmra.mrb[0].mxu0 %v1105
        %v1424 = vpop.f32.mrb[0].mxu0
        %v1425 = vadd.f32 %v1008, %v1424
        %v1426 = vpop.f32.mrb[0].mxu0
        %1427 = vmatprep.mubr.f32.mxu0 0.0
        %1428 = vmatmul.mubr.f32.gmra.mrb[0].mxu0 %v1108
        %v1429 = vpop.f32.mrb[0].mxu0
        %v1430 = vadd.f32 %v1008, %v1429
        %v1431 = vpop.f32.mrb[0].mxu0
        %1432 = vmatprep.mubr.f32.mxu0 0.0
        %1433 = vmatmul.mubr.f32.gmra.mrb[0].mxu0 %v1111
        %v1434 = vpop.f32.mrb[0].mxu0
        %v1435 = vadd.f32 %v1008, %v1434
        %v1436 = vpop.f32.mrb[0].mxu0
        %1437 = vmatprep.mubr.f32.mxu0 0.0
        %1438 = vmatmul.mubr.f32.gmra.mrb[0].mxu0 %v1114
        %v1439 = vpop.f32.mrb[0].mxu0
        %v1440 = vadd.f32 %v1008, %v1439
        %v1441 = vpop.f32.mrb[0].mxu0
        %1442 = vmatprep.mubr.f32.mxu0 0.0
        %1443 = vmatmul.mubr.f32.gmra.mrb[0].mxu0 %v1117
        %v1444 = vpop.f32.mrb[0].mxu0
        %v1445 = vadd.f32 %v1008, %v1444
        %v1446 = vpop.f32.mrb[0].mxu0
        %1447 = vmatprep.mubr.f32.mxu0 0.0
        %1448 = vmatmul.mubr.f32.gmra.mrb[0].mxu0 %v1120
        %v1449 = vpop.f32.mrb[0].mxu0
        %v1450 = vadd.f32 %v1008, %v1449
        %v1451 = vpop.f32.mrb[0].mxu0
        %1452 = vmatprep.mubr.f32.mxu0 0.0
        %1453 = vmatmul.mubr.f32.gmra.mrb[0].mxu0 %v1123
        %v1454 = vpop.f32.mrb[0].mxu0
        %v1455 = vadd.f32 %v1008, %v1454
        %v1456 = vpop.f32.mrb[0].mxu0
        %1457 = vmatprep.mubr.f32.mxu0 0.0
        %1458 = vmatmul.mubr.f32.gmra.mrb[0].mxu0 %v1126
        %v1459 = vpop.f32.mrb[0].mxu0
        %v1460 = vadd.f32 %v1008, %v1459
        %v1461 = vpop.f32.mrb[0].mxu0
        %1462 = vmatprep.mubr.f32.mxu0 0.0
        %1463 = vmatmul.mubr.f32.gmra.mrb[0].mxu0 %v1129
        %v1464 = vpop.f32.mrb[0].mxu0
        %v1465 = vadd.f32 %v1008, %v1464
        %v1466 = vpop.f32.mrb[0].mxu0
        %1467 = vmatprep.mubr.f32.mxu0 0.0
        %1468 = vmatmul.mubr.f32.gmra.mrb[0].mxu0 %v1132
        %v1469 = vpop.f32.mrb[0].mxu0
        %v1470 = vadd.f32 %v1008, %v1469
        %v1471 = vpop.f32.mrb[0].mxu0
        %1472 = vmatprep.mubr.f32.mxu0 0.0
        %1473 = vmatmul.mubr.f32.gmra.mrb[0].mxu0 %v1135
        %v1474 = vpop.f32.mrb[0].mxu0
        %v1475 = vadd.f32 %v1008, %v1474
        %v1476 = vpop.f32.mrb[0].mxu0
        %1477 = vmatprep.mubr.f32.mxu0 0.0
        %1478 = vmatmul.mubr.f32.gmra.mrb[0].mxu0 %v1138
        %v1479 = vpop.f32.mrb[0].mxu0
        %v1480 = vadd.f32 %v1008, %v1479
        %v1481 = vpop.f32.mrb[0].mxu0
        %1482 = vmatprep.mubr.f32.mxu0 0.0
        %1483 = vmatmul.mubr.f32.gmra.mrb[0].mxu0 %v1141
        %v1484 = vpop.f32.mrb[0].mxu0
        %v1485 = vadd.f32 %v1008, %v1484
        %v1486 = vpop.f32.mrb[0].mxu0
        %1487 = vmatprep.mubr.f32.mxu0 0.0
        %1488 = vmatmul.mubr.f32.gmra.mrb[0].mxu0 %v1144
        %v1489 = vpop.f32.mrb[0].mxu0
        %v1490 = vadd.f32 %v1008, %v1489
        %v1491 = vpop.f32.mrb[0].mxu0
        %1492 = vmatprep.mubr.f32.mxu0 0.0
        %1493 = vmatmul.mubr.f32.gmra.mrb[0].mxu0 %v1147
        %v1494 = vpop.f32.mrb[0].mxu0
        %v1495 = vadd.f32 %v1008, %v1494
        %v1496 = vpop.f32.mrb[0].mxu0
        %1497 = vmatprep.mubr.f32.mxu0 0.0
        %1498 = vmatmul.mubr.f32.gmra.mrb[0].mxu0 %v1150
        %v1499 = vpop.f32.mrb[0].mxu0
        %v1500 = vadd.f32 %v1008, %v1499
        %v1501 = vpop.f32.mrb[0].mxu0
        %1502 = vmatprep.mubr.f32.mxu0 0.0
        %1503 = vmatmul.mubr.f32.gmra.mrb[0].mxu0 %v1153
        %v1504 = vpop.f32.mrb[0].mxu0
        %v1505 = vadd.f32 %v1008, %v1504
        %v1506 = vpop.f32.mrb[0].mxu0
        %1507 = vmatprep.mubr.f32.mxu0 0.0
        %1508 = vmatmul.mubr.f32.gmra.mrb[0].mxu0 %v1156
        %v1509 = vpop.f32.mrb[0].mxu0
        %v1510 = vadd.f32 %v1008, %v1509
        %v1511 = vpop.f32.mrb[0].mxu0
        %1512 = vmatprep.mubr.f32.mxu0 0.0
        %1513 = vmatmul.mubr.f32.gmra.mrb[0].mxu0 %v1159
        %v1514 = vpop.f32.mrb[0].mxu0
        %v1515 = vadd.f32 %v1008, %v1514
        %v1516 = vpop.f32.mrb[0].mxu0
        %1517 = vmatprep.mubr.f32.mxu0 0.0
        %1518 = vmatmul.mubr.f32.gmra.mrb[0].mxu0 %v1162
        %v1519 = vpop.f32.mrb[0].mxu0
        %v1520 = vadd.f32 %v1008, %v1519
        %v1521 = vpop.f32.mrb[0].mxu0
        %1522 = vmatprep.mubr.f32.mxu0 0.0
        %1523 = vmatmul.mubr.f32.gmra.mrb[0].mxu0 %v1165
        %v1524 = vpop.f32.mrb[0].mxu0
        %v1525 = vadd.f32 %v1008, %v1524
        %v1526 = vpop.f32.mrb[0].mxu0
        %1527 = vmatprep.mubr.f32.mxu0 0.0
        %1528 = vmatmul.mubr.f32.gmra.mrb[0].mxu0 %v1168
        %v1529 = vpop.f32.mrb[0].mxu0
        %v1530 = vadd.f32 %v1008, %v1529
        %v1531 = vpop.f32.mrb[0].mxu0
        %1532 = vmatprep.mubr.f32.mxu0 0.0
        %1533 = vmatmul.mubr.f32.gmra.mrb[0].mxu0 %v1171
        %v1534 = vpop.f32.mrb[0].mxu0
        %v1535 = vadd.f32 %v1008, %v1534
        %v1536 = vpop.f32.mrb[0].mxu0
        %1537 = vmatprep.mubr.f32.mxu0 0.0
        %1538 = vmatmul.mubr.f32.gmra.mrb[0].mxu0 %v1174
        %v1539 = vpop.f32.mrb[0].mxu0
        %v1540 = vadd.f32 %v1008, %v1539
        %v1541 = vpop.f32.mrb[0].mxu0
        %1542 = vmatprep.mubr.f32.mxu0 0.0
        %1543 = vmatmul.mubr.f32.gmra.mrb[0].mxu0 %v1177
        %v1544 = vpop.f32.mrb[0].mxu0
        %v1545 = vadd.f32 %v1008, %v1544
        %v1546 = vpop.f32.mrb[0].mxu0
        %1547 = vmatprep.mubr.f32.mxu0 0.0
        %1548 = vmatmul.mubr.f32.gmra.mrb[0].mxu0 %v1180
        %v1549 = vpop.f32.mrb[0].mxu0
        %v1550 = vadd.f32 %v1008, %v1549
        %v1551 = vpop.f32.mrb[0].mxu0
        %1552 = vmatprep.mubr.f32.mxu0 0.0
        %1553 = vmatmul.mubr.f32.gmra.mrb[0].mxu0 %v1183
        %v1554 = vpop.f32.mrb[0].mxu0
        %v1555 = vadd.f32 %v1008, %v1554
        %v1556 = vpop.f32.mrb[0].mxu0
        %1557 = vmatprep.mubr.f32.mxu0 0.0
        %1558 = vmatmul.mubr.f32.gmra.mrb[0].mxu0 %v1186
        %v1559 = vpop.f32.mrb[0].mxu0
        %v1560 = vadd.f32 %v1008, %v1559
        %v1561 = vpop.f32.mrb[0].mxu0
        %1562 = vmatprep.mubr.f32.mxu0 0.0
        %1563 = vmatmul.mubr.f32.gmra.mrb[0].mxu0 %v1189
        %v1564 = vpop.f32.mrb[0].mxu0
        %v1565 = vadd.f32 %v1008, %v1564
        %v1566 = vpop.f32.mrb[0].mxu0
        %1567 = vmatprep.mubr.f32.mxu0 0.0
        %1568 = vmatmul.mubr.f32.gmra.mrb[0].mxu0 %v1192
        %v1569 = vpop.f32.mrb[0].mxu0
        %v1570 = vadd.f32 %v1008, %v1569
        %v1571 = vpop.f32.mrb[0].mxu0
        %1572 = vmatprep.mubr.f32.mxu0 0.0
        %1573 = vmatmul.mubr.f32.gmra.mrb[0].mxu0 %v1195
        %v1574 = vpop.f32.mrb[0].mxu0
        %v1575 = vadd.f32 %v1008, %v1574
        %v1576 = vpop.f32.mrb[0].mxu0
        %1577 = vmatprep.mubr.f32.mxu0 0.0
        %1578 = vmatmul.mubr.f32.gmra.mrb[0].mxu0 %v1198
        %v1579 = vpop.f32.mrb[0].mxu0
        %v1580 = vadd.f32 %v1008, %v1579
        %v1581 = vpop.f32.mrb[0].mxu0
        %1582 = vmatprep.mubr.f32.mxu0 0.0
        %1583 = vmatmul.mubr.f32.gmra.mrb[0].mxu0 %v1201
        %v1584 = vpop.f32.mrb[0].mxu0
        %v1585 = vadd.f32 %v1008, %v1584
        %v1586 = vpop.f32.mrb[0].mxu0
        %1587 = vdwg.mxu0
        %v1588 = vtanh.pop %v1270
        %v1589 = vtanh.pop %v1275
        %v1590 = vtanh.pop %v1280
        %v1591 = vtanh.pop %v1285
        %v1592 = vtanh.pop %v1290
        %v1593 = vtanh.pop %v1295
        %v1594 = vtanh.pop %v1300
        %v1595 = vtanh.pop %v1305
        %v1596 = vtanh.pop %v1310
        %v1597 = vtanh.pop %v1315
        %v1598 = vtanh.pop %v1320
        %v1599 = vtanh.pop %v1325
        %v1600 = vtanh.pop %v1330
        %v1601 = vtanh.pop %v1335
        %v1602 = vtanh.pop %v1340
        %v1603 = vtanh.pop %v1345
        %v1604 = vtanh.pop %v1350
        %v1605 = vtanh.pop %v1355
        %v1606 = vtanh.pop %v1360
        %v1607 = vtanh.pop %v1365
        %v1608 = vtanh.pop %v1370
        %v1609 = vtanh.pop %v1375
        %v1610 = vtanh.pop %v1380
        %v1611 = vtanh.pop %v1385
        %v1612 = vtanh.pop %v1390
        %v1613 = vtanh.pop %v1395
        %v1614 = vtanh.pop %v1400
        %v1615 = vtanh.pop %v1405
        %v1616 = vtanh.pop %v1410
        %v1617 = vtanh.pop %v1415
        %v1618 = vtanh.pop %v1420
        %v1619 = vtanh.pop %v1425
        %v1620 = vtanh.pop %v1430
        %v1621 = vtanh.pop %v1435
        %v1622 = vtanh.pop %v1440
        %v1623 = vtanh.pop %v1445
        %v1624 = vtanh.pop %v1450
        %v1625 = vtanh.pop %v1455
        %v1626 = vtanh.pop %v1460
        %v1627 = vtanh.pop %v1465
        %v1628 = vtanh.pop %v1470
        %v1629 = vtanh.pop %v1475
        %v1630 = vtanh.pop %v1480
        %v1631 = vtanh.pop %v1485
        %v1632 = vtanh.pop %v1490
        %v1633 = vtanh.pop %v1495
        %v1634 = vtanh.pop %v1500
        %v1635 = vtanh.pop %v1505
        %v1636 = vtanh.pop %v1510
        %v1637 = vtanh.pop %v1515
        %v1638 = vtanh.pop %v1520
        %v1639 = vtanh.pop %v1525
        %v1640 = vtanh.pop %v1530
        %v1641 = vtanh.pop %v1535
        %v1642 = vtanh.pop %v1540
        %v1643 = vtanh.pop %v1545
        %v1644 = vtanh.pop %v1550
        %v1645 = vtanh.pop %v1555
        %v1646 = vtanh.pop %v1560
        %v1647 = vtanh.pop %v1565
        %v1648 = vtanh.pop %v1570
        %v1649 = vtanh.pop %v1575
        %v1650 = vtanh.pop %v1580
        %v1651 = vtanh.pop %v1585
        %v1652 = vld [vmem:[%s5] sm:$0xff]
        %v1653 = vld [vmem:[%s5 + $0x8] sm:$0xff]
        %v1654 = vld [vmem:[%s5 + $0x10] sm:$0xff]
        %v1655 = vld [vmem:[%s5 + $0x18] sm:$0xff]
        %v1656 = vld [vmem:[%s5 + $0x20] sm:$0xff]
        %v1657 = vld [vmem:[%s5 + $0x28] sm:$0xff]
        %v1658 = vld [vmem:[%s5 + $0x30] sm:$0xff]
        %v1659 = vld [vmem:[%s5 + $0x38] sm:$0xff]
        %v1660 = vld [vmem:[%s6] sm:$0x1]
        %v1662 = vlaneseq
        %v1663 = vshrl.u32 %v1662, 7
        %v1664 = vsub.s32 0, %v1663
        %v1665 = vrot.slane %v1660, %v1664
        %v1668 = vsel %vm1010, %v1588, 0
        %v1671 = vsel %vm1010, %v1589, 0
        %v1674 = vsel %vm1010, %v1590, 0
        %v1677 = vsel %vm1010, %v1591, 0
        %v1680 = vsel %vm1010, %v1592, 0
        %v1683 = vsel %vm1010, %v1593, 0
        %v1686 = vsel %vm1010, %v1594, 0
        %v1689 = vsel %vm1010, %v1595, 0
        %v1692 = vsel %vm1010, %v1596, 0
        %v1695 = vsel %vm1010, %v1597, 0
        %v1698 = vsel %vm1010, %v1598, 0
        %v1701 = vsel %vm1010, %v1599, 0
        %v1704 = vsel %vm1010, %v1600, 0
        %v1707 = vsel %vm1010, %v1601, 0
        %v1710 = vsel %vm1010, %v1602, 0
        %v1713 = vsel %vm1010, %v1603, 0
        %v1716 = vsel %vm1010, %v1604, 0
        %v1719 = vsel %vm1010, %v1605, 0
        %v1722 = vsel %vm1010, %v1606, 0
        %v1725 = vsel %vm1010, %v1607, 0
        %v1728 = vsel %vm1010, %v1608, 0
        %v1731 = vsel %vm1010, %v1609, 0
        %v1734 = vsel %vm1010, %v1610, 0
        %v1737 = vsel %vm1010, %v1611, 0
        %v1740 = vsel %vm1010, %v1612, 0
        %v1743 = vsel %vm1010, %v1613, 0
        %v1746 = vsel %vm1010, %v1614, 0
        %v1749 = vsel %vm1010, %v1615, 0
        %v1752 = vsel %vm1010, %v1616, 0
        %v1755 = vsel %vm1010, %v1617, 0
        %v1758 = vsel %vm1010, %v1618, 0
        %v1761 = vsel %vm1010, %v1619, 0
        %v1764 = vsel %vm1010, %v1620, 0
        %v1767 = vsel %vm1010, %v1621, 0
        %v1770 = vsel %vm1010, %v1622, 0
        %v1773 = vsel %vm1010, %v1623, 0
        %v1776 = vsel %vm1010, %v1624, 0
        %v1779 = vsel %vm1010, %v1625, 0
        %v1782 = vsel %vm1010, %v1626, 0
        %v1785 = vsel %vm1010, %v1627, 0
        %v1788 = vsel %vm1010, %v1628, 0
        %v1791 = vsel %vm1010, %v1629, 0
        %v1794 = vsel %vm1010, %v1630, 0
        %v1797 = vsel %vm1010, %v1631, 0
        %v1800 = vsel %vm1010, %v1632, 0
        %v1803 = vsel %vm1010, %v1633, 0
        %v1806 = vsel %vm1010, %v1634, 0
        %v1809 = vsel %vm1010, %v1635, 0
        %v1812 = vsel %vm1010, %v1636, 0
        %v1815 = vsel %vm1010, %v1637, 0
        %v1818 = vsel %vm1010, %v1638, 0
        %v1821 = vsel %vm1010, %v1639, 0
        %v1824 = vsel %vm1010, %v1640, 0
        %v1827 = vsel %vm1010, %v1641, 0
        %v1830 = vsel %vm1010, %v1642, 0
        %v1833 = vsel %vm1010, %v1643, 0
        %v1836 = vsel %vm1010, %v1644, 0
        %v1839 = vsel %vm1010, %v1645, 0
        %v1842 = vsel %vm1010, %v1646, 0
        %v1845 = vsel %vm1010, %v1647, 0
        %v1848 = vsel %vm1010, %v1648, 0
        %v1851 = vsel %vm1010, %v1649, 0
        %v1854 = vsel %vm1010, %v1650, 0
        %v1857 = vsel %vm1010, %v1651, 0
        %1859 = vmatprep.subr.mxu0 0.0
        %1860 = vmatpush1.msra.mxu0 %v1652
        %1861 = vmatprep.subr.mxu0 0.0
        %1862 = vmatpush1.msra.mxu0 %v1653
        %1863 = vmatprep.subr.mxu0 0.0
        %1864 = vmatpush1.msra.mxu0 %v1654
        %1865 = vmatprep.subr.mxu0 0.0
        %1866 = vmatpush1.msra.mxu0 %v1655
        %1867 = vmatprep.subr.mxu0 0.0
        %1868 = vmatpush1.msra.mxu0 %v1656
        %1869 = vmatprep.subr.mxu0 0.0
        %1870 = vmatpush1.msra.mxu0 %v1657
        %1871 = vmatprep.subr.mxu0 0.0
        %1872 = vmatpush1.msra.mxu0 %v1658
        %1873 = vmatprep.subr.mxu0 0.0
        %1874 = vmatpush1.msra.mxu0 %v1659
        %1875 = vmatprep.subr.mxu0 0.0
        %1876 = vmatpush1.msra.mxu0 0.0
        %1877 = vmatprep.subr.mxu0 0.0
        %1878 = vmatpush1.msra.mxu0 0.0
        %1879 = vmatprep.subr.mxu0 0.0
        %1880 = vmatpush1.msra.mxu0 0.0
        %1881 = vmatprep.subr.mxu0 0.0
        %1882 = vmatpush1.msra.mxu0 0.0
        %1883 = vmatprep.subr.mxu0 0.0
        %1884 = vmatpush1.msra.mxu0 0.0
        %1885 = vmatprep.subr.mxu0 0.0
        %1886 = vmatpush1.msra.mxu0 0.0
        %1887 = vmatprep.subr.mxu0 0.0
        %1888 = vmatpush1.msra.mxu0 0.0
        %1889 = vmatprep.subr.mxu0 0.0
        %1890 = vmatpush1.msra.mxu0 0.0
        %1891 = vmatprep.subr.mxu0 0.0
        %1892 = vmatpush1.msra.mxu0 0.0
        %1893 = vmatprep.subr.mxu0 0.0
        %1894 = vmatpush1.msra.mxu0 0.0
        %1895 = vmatprep.subr.mxu0 0.0
        %1896 = vmatpush1.msra.mxu0 0.0
        %1897 = vmatprep.subr.mxu0 0.0
        %1898 = vmatpush1.msra.mxu0 0.0
        %1899 = vmatprep.subr.mxu0 0.0
        %1900 = vmatpush1.msra.mxu0 0.0
        %1901 = vmatprep.subr.mxu0 0.0
        %1902 = vmatpush1.msra.mxu0 0.0
        %1903 = vmatprep.subr.mxu0 0.0
        %1904 = vmatpush1.msra.mxu0 0.0
        %1905 = vmatprep.subr.mxu0 0.0
        %1906 = vmatpush1.msra.mxu0 0.0
        %1907 = vmatprep.subr.mxu0 0.0
        %1908 = vmatpush1.msra.mxu0 0.0
        %1909 = vmatprep.subr.mxu0 0.0
        %1910 = vmatpush1.msra.mxu0 0.0
        %1911 = vmatprep.subr.mxu0 0.0
        %1912 = vmatpush1.msra.mxu0 0.0
        %1913 = vmatprep.subr.mxu0 0.0
        %1914 = vmatpush1.msra.mxu0 0.0
        %1915 = vmatprep.subr.mxu0 0.0
        %1916 = vmatpush1.msra.mxu0 0.0
        %1917 = vmatprep.subr.mxu0 0.0
        %1918 = vmatpush1.msra.mxu0 0.0
        %1919 = vmatprep.subr.mxu0 0.0
        %1920 = vmatpush1.msra.mxu0 0.0
        %1921 = vmatprep.subr.mxu0 0.0
        %1922 = vmatpush1.msra.mxu0 0.0
        %1923 = vmatprep.mubr.f32.mxu0 0.0
        %1924 = vmatmul.mubr.f32.gmra.mrb[0].mxu0 %v1668
        %v1925 = vpop.f32.mrb[0].mxu0
        %v1926 = vadd.f32 %v1665, %v1925
        %v1927 = vpop.f32.mrb[0].mxu0
        %1928 = vmatprep.mubr.f32.mxu0 0.0
        %1929 = vmatmul.mubr.f32.gmra.mrb[0].mxu0 %v1671
        %v1930 = vpop.f32.mrb[0].mxu0
        %v1931 = vadd.f32 %v1665, %v1930
        %v1932 = vpop.f32.mrb[0].mxu0
        %1933 = vmatprep.mubr.f32.mxu0 0.0
        %1934 = vmatmul.mubr.f32.gmra.mrb[0].mxu0 %v1674
        %v1935 = vpop.f32.mrb[0].mxu0
        %v1936 = vadd.f32 %v1665, %v1935
        %v1937 = vpop.f32.mrb[0].mxu0
        %1938 = vmatprep.mubr.f32.mxu0 0.0
        %1939 = vmatmul.mubr.f32.gmra.mrb[0].mxu0 %v1677
        %v1940 = vpop.f32.mrb[0].mxu0
        %v1941 = vadd.f32 %v1665, %v1940
        %v1942 = vpop.f32.mrb[0].mxu0
        %1943 = vmatprep.mubr.f32.mxu0 0.0
        %1944 = vmatmul.mubr.f32.gmra.mrb[0].mxu0 %v1680
        %v1945 = vpop.f32.mrb[0].mxu0
        %v1946 = vadd.f32 %v1665, %v1945
        %v1947 = vpop.f32.mrb[0].mxu0
        %1948 = vmatprep.mubr.f32.mxu0 0.0
        %1949 = vmatmul.mubr.f32.gmra.mrb[0].mxu0 %v1683
        %v1950 = vpop.f32.mrb[0].mxu0
        %v1951 = vadd.f32 %v1665, %v1950
        %v1952 = vpop.f32.mrb[0].mxu0
        %1953 = vmatprep.mubr.f32.mxu0 0.0
        %1954 = vmatmul.mubr.f32.gmra.mrb[0].mxu0 %v1686
        %v1955 = vpop.f32.mrb[0].mxu0
        %v1956 = vadd.f32 %v1665, %v1955
        %v1957 = vpop.f32.mrb[0].mxu0
        %1958 = vmatprep.mubr.f32.mxu0 0.0
        %1959 = vmatmul.mubr.f32.gmra.mrb[0].mxu0 %v1689
        %v1960 = vpop.f32.mrb[0].mxu0
        %v1961 = vadd.f32 %v1665, %v1960
        %v1962 = vpop.f32.mrb[0].mxu0
        %1963 = vmatprep.mubr.f32.mxu0 0.0
        %1964 = vmatmul.mubr.f32.gmra.mrb[0].mxu0 %v1692
        %v1965 = vpop.f32.mrb[0].mxu0
        %v1966 = vadd.f32 %v1665, %v1965
        %v1967 = vpop.f32.mrb[0].mxu0
        %1968 = vmatprep.mubr.f32.mxu0 0.0
        %1969 = vmatmul.mubr.f32.gmra.mrb[0].mxu0 %v1695
        %v1970 = vpop.f32.mrb[0].mxu0
        %v1971 = vadd.f32 %v1665, %v1970
        %v1972 = vpop.f32.mrb[0].mxu0
        %1973 = vmatprep.mubr.f32.mxu0 0.0
        %1974 = vmatmul.mubr.f32.gmra.mrb[0].mxu0 %v1698
        %v1975 = vpop.f32.mrb[0].mxu0
        %v1976 = vadd.f32 %v1665, %v1975
        %v1977 = vpop.f32.mrb[0].mxu0
        %1978 = vmatprep.mubr.f32.mxu0 0.0
        %1979 = vmatmul.mubr.f32.gmra.mrb[0].mxu0 %v1701
        %v1980 = vpop.f32.mrb[0].mxu0
        %v1981 = vadd.f32 %v1665, %v1980
        %v1982 = vpop.f32.mrb[0].mxu0
        %1983 = vmatprep.mubr.f32.mxu0 0.0
        %1984 = vmatmul.mubr.f32.gmra.mrb[0].mxu0 %v1704
        %v1985 = vpop.f32.mrb[0].mxu0
        %v1986 = vadd.f32 %v1665, %v1985
        %v1987 = vpop.f32.mrb[0].mxu0
        %1988 = vmatprep.mubr.f32.mxu0 0.0
        %1989 = vmatmul.mubr.f32.gmra.mrb[0].mxu0 %v1707
        %v1990 = vpop.f32.mrb[0].mxu0
        %v1991 = vadd.f32 %v1665, %v1990
        %v1992 = vpop.f32.mrb[0].mxu0
        %1993 = vmatprep.mubr.f32.mxu0 0.0
        %1994 = vmatmul.mubr.f32.gmra.mrb[0].mxu0 %v1710
        %v1995 = vpop.f32.mrb[0].mxu0
        %v1996 = vadd.f32 %v1665, %v1995
        %v1997 = vpop.f32.mrb[0].mxu0
        %1998 = vmatprep.mubr.f32.mxu0 0.0
        %1999 = vmatmul.mubr.f32.gmra.mrb[0].mxu0 %v1713
        %v2000 = vpop.f32.mrb[0].mxu0
        %v2001 = vadd.f32 %v1665, %v2000
        %v2002 = vpop.f32.mrb[0].mxu0
        %2003 = vmatprep.mubr.f32.mxu0 0.0
        %2004 = vmatmul.mubr.f32.gmra.mrb[0].mxu0 %v1716
        %v2005 = vpop.f32.mrb[0].mxu0
        %v2006 = vadd.f32 %v1665, %v2005
        %v2007 = vpop.f32.mrb[0].mxu0
        %2008 = vmatprep.mubr.f32.mxu0 0.0
        %2009 = vmatmul.mubr.f32.gmra.mrb[0].mxu0 %v1719
        %v2010 = vpop.f32.mrb[0].mxu0
        %v2011 = vadd.f32 %v1665, %v2010
        %v2012 = vpop.f32.mrb[0].mxu0
        %2013 = vmatprep.mubr.f32.mxu0 0.0
        %2014 = vmatmul.mubr.f32.gmra.mrb[0].mxu0 %v1722
        %v2015 = vpop.f32.mrb[0].mxu0
        %v2016 = vadd.f32 %v1665, %v2015
        %v2017 = vpop.f32.mrb[0].mxu0
        %2018 = vmatprep.mubr.f32.mxu0 0.0
        %2019 = vmatmul.mubr.f32.gmra.mrb[0].mxu0 %v1725
        %v2020 = vpop.f32.mrb[0].mxu0
        %v2021 = vadd.f32 %v1665, %v2020
        %v2022 = vpop.f32.mrb[0].mxu0
        %2023 = vmatprep.mubr.f32.mxu0 0.0
        %2024 = vmatmul.mubr.f32.gmra.mrb[0].mxu0 %v1728
        %v2025 = vpop.f32.mrb[0].mxu0
        %v2026 = vadd.f32 %v1665, %v2025
        %v2027 = vpop.f32.mrb[0].mxu0
        %2028 = vmatprep.mubr.f32.mxu0 0.0
        %2029 = vmatmul.mubr.f32.gmra.mrb[0].mxu0 %v1731
        %v2030 = vpop.f32.mrb[0].mxu0
        %v2031 = vadd.f32 %v1665, %v2030
        %v2032 = vpop.f32.mrb[0].mxu0
        %2033 = vmatprep.mubr.f32.mxu0 0.0
        %2034 = vmatmul.mubr.f32.gmra.mrb[0].mxu0 %v1734
        %v2035 = vpop.f32.mrb[0].mxu0
        %v2036 = vadd.f32 %v1665, %v2035
        %v2037 = vpop.f32.mrb[0].mxu0
        %2038 = vmatprep.mubr.f32.mxu0 0.0
        %2039 = vmatmul.mubr.f32.gmra.mrb[0].mxu0 %v1737
        %v2040 = vpop.f32.mrb[0].mxu0
        %v2041 = vadd.f32 %v1665, %v2040
        %v2042 = vpop.f32.mrb[0].mxu0
        %2043 = vmatprep.mubr.f32.mxu0 0.0
        %2044 = vmatmul.mubr.f32.gmra.mrb[0].mxu0 %v1740
        %v2045 = vpop.f32.mrb[0].mxu0
        %v2046 = vadd.f32 %v1665, %v2045
        %v2047 = vpop.f32.mrb[0].mxu0
        %2048 = vmatprep.mubr.f32.mxu0 0.0
        %2049 = vmatmul.mubr.f32.gmra.mrb[0].mxu0 %v1743
        %v2050 = vpop.f32.mrb[0].mxu0
        %v2051 = vadd.f32 %v1665, %v2050
        %v2052 = vpop.f32.mrb[0].mxu0
        %2053 = vmatprep.mubr.f32.mxu0 0.0
        %2054 = vmatmul.mubr.f32.gmra.mrb[0].mxu0 %v1746
        %v2055 = vpop.f32.mrb[0].mxu0
        %v2056 = vadd.f32 %v1665, %v2055
        %v2057 = vpop.f32.mrb[0].mxu0
        %2058 = vmatprep.mubr.f32.mxu0 0.0
        %2059 = vmatmul.mubr.f32.gmra.mrb[0].mxu0 %v1749
        %v2060 = vpop.f32.mrb[0].mxu0
        %v2061 = vadd.f32 %v1665, %v2060
        %v2062 = vpop.f32.mrb[0].mxu0
        %2063 = vmatprep.mubr.f32.mxu0 0.0
        %2064 = vmatmul.mubr.f32.gmra.mrb[0].mxu0 %v1752
        %v2065 = vpop.f32.mrb[0].mxu0
        %v2066 = vadd.f32 %v1665, %v2065
        %v2067 = vpop.f32.mrb[0].mxu0
        %2068 = vmatprep.mubr.f32.mxu0 0.0
        %2069 = vmatmul.mubr.f32.gmra.mrb[0].mxu0 %v1755
        %v2070 = vpop.f32.mrb[0].mxu0
        %v2071 = vadd.f32 %v1665, %v2070
        %v2072 = vpop.f32.mrb[0].mxu0
        %2073 = vmatprep.mubr.f32.mxu0 0.0
        %2074 = vmatmul.mubr.f32.gmra.mrb[0].mxu0 %v1758
        %v2075 = vpop.f32.mrb[0].mxu0
        %v2076 = vadd.f32 %v1665, %v2075
        %v2077 = vpop.f32.mrb[0].mxu0
        %2078 = vmatprep.mubr.f32.mxu0 0.0
        %2079 = vmatmul.mubr.f32.gmra.mrb[0].mxu0 %v1761
        %v2080 = vpop.f32.mrb[0].mxu0
        %v2081 = vadd.f32 %v1665, %v2080
        %v2082 = vpop.f32.mrb[0].mxu0
        %2083 = vmatprep.mubr.f32.mxu0 0.0
        %2084 = vmatmul.mubr.f32.gmra.mrb[0].mxu0 %v1764
        %v2085 = vpop.f32.mrb[0].mxu0
        %v2086 = vadd.f32 %v1665, %v2085
        %v2087 = vpop.f32.mrb[0].mxu0
        %2088 = vmatprep.mubr.f32.mxu0 0.0
        %2089 = vmatmul.mubr.f32.gmra.mrb[0].mxu0 %v1767
        %v2090 = vpop.f32.mrb[0].mxu0
        %v2091 = vadd.f32 %v1665, %v2090
        %v2092 = vpop.f32.mrb[0].mxu0
        %2093 = vmatprep.mubr.f32.mxu0 0.0
        %2094 = vmatmul.mubr.f32.gmra.mrb[0].mxu0 %v1770
        %v2095 = vpop.f32.mrb[0].mxu0
        %v2096 = vadd.f32 %v1665, %v2095
        %v2097 = vpop.f32.mrb[0].mxu0
        %2098 = vmatprep.mubr.f32.mxu0 0.0
        %2099 = vmatmul.mubr.f32.gmra.mrb[0].mxu0 %v1773
        %v2100 = vpop.f32.mrb[0].mxu0
        %v2101 = vadd.f32 %v1665, %v2100
        %v2102 = vpop.f32.mrb[0].mxu0
        %2103 = vmatprep.mubr.f32.mxu0 0.0
        %2104 = vmatmul.mubr.f32.gmra.mrb[0].mxu0 %v1776
        %v2105 = vpop.f32.mrb[0].mxu0
        %v2106 = vadd.f32 %v1665, %v2105
        %v2107 = vpop.f32.mrb[0].mxu0
        %2108 = vmatprep.mubr.f32.mxu0 0.0
        %2109 = vmatmul.mubr.f32.gmra.mrb[0].mxu0 %v1779
        %v2110 = vpop.f32.mrb[0].mxu0
        %v2111 = vadd.f32 %v1665, %v2110
        %v2112 = vpop.f32.mrb[0].mxu0
        %2113 = vmatprep.mubr.f32.mxu0 0.0
        %2114 = vmatmul.mubr.f32.gmra.mrb[0].mxu0 %v1782
        %v2115 = vpop.f32.mrb[0].mxu0
        %v2116 = vadd.f32 %v1665, %v2115
        %v2117 = vpop.f32.mrb[0].mxu0
        %2118 = vmatprep.mubr.f32.mxu0 0.0
        %2119 = vmatmul.mubr.f32.gmra.mrb[0].mxu0 %v1785
        %v2120 = vpop.f32.mrb[0].mxu0
        %v2121 = vadd.f32 %v1665, %v2120
        %v2122 = vpop.f32.mrb[0].mxu0
        %2123 = vmatprep.mubr.f32.mxu0 0.0
        %2124 = vmatmul.mubr.f32.gmra.mrb[0].mxu0 %v1788
        %v2125 = vpop.f32.mrb[0].mxu0
        %v2126 = vadd.f32 %v1665, %v2125
        %v2127 = vpop.f32.mrb[0].mxu0
        %2128 = vmatprep.mubr.f32.mxu0 0.0
        %2129 = vmatmul.mubr.f32.gmra.mrb[0].mxu0 %v1791
        %v2130 = vpop.f32.mrb[0].mxu0
        %v2131 = vadd.f32 %v1665, %v2130
        %v2132 = vpop.f32.mrb[0].mxu0
        %2133 = vmatprep.mubr.f32.mxu0 0.0
        %2134 = vmatmul.mubr.f32.gmra.mrb[0].mxu0 %v1794
        %v2135 = vpop.f32.mrb[0].mxu0
        %v2136 = vadd.f32 %v1665, %v2135
        %v2137 = vpop.f32.mrb[0].mxu0
        %2138 = vmatprep.mubr.f32.mxu0 0.0
        %2139 = vmatmul.mubr.f32.gmra.mrb[0].mxu0 %v1797
        %v2140 = vpop.f32.mrb[0].mxu0
        %v2141 = vadd.f32 %v1665, %v2140
        %v2142 = vpop.f32.mrb[0].mxu0
        %2143 = vmatprep.mubr.f32.mxu0 0.0
        %2144 = vmatmul.mubr.f32.gmra.mrb[0].mxu0 %v1800
        %v2145 = vpop.f32.mrb[0].mxu0
        %v2146 = vadd.f32 %v1665, %v2145
        %v2147 = vpop.f32.mrb[0].mxu0
        %2148 = vmatprep.mubr.f32.mxu0 0.0
        %2149 = vmatmul.mubr.f32.gmra.mrb[0].mxu0 %v1803
        %v2150 = vpop.f32.mrb[0].mxu0
        %v2151 = vadd.f32 %v1665, %v2150
        %v2152 = vpop.f32.mrb[0].mxu0
        %2153 = vmatprep.mubr.f32.mxu0 0.0
        %2154 = vmatmul.mubr.f32.gmra.mrb[0].mxu0 %v1806
        %v2155 = vpop.f32.mrb[0].mxu0
        %v2156 = vadd.f32 %v1665, %v2155
        %v2157 = vpop.f32.mrb[0].mxu0
        %2158 = vmatprep.mubr.f32.mxu0 0.0
        %2159 = vmatmul.mubr.f32.gmra.mrb[0].mxu0 %v1809
        %v2160 = vpop.f32.mrb[0].mxu0
        %v2161 = vadd.f32 %v1665, %v2160
        %v2162 = vpop.f32.mrb[0].mxu0
        %2163 = vmatprep.mubr.f32.mxu0 0.0
        %2164 = vmatmul.mubr.f32.gmra.mrb[0].mxu0 %v1812
        %v2165 = vpop.f32.mrb[0].mxu0
        %v2166 = vadd.f32 %v1665, %v2165
        %v2167 = vpop.f32.mrb[0].mxu0
        %2168 = vmatprep.mubr.f32.mxu0 0.0
        %2169 = vmatmul.mubr.f32.gmra.mrb[0].mxu0 %v1815
        %v2170 = vpop.f32.mrb[0].mxu0
        %v2171 = vadd.f32 %v1665, %v2170
        %v2172 = vpop.f32.mrb[0].mxu0
        %2173 = vmatprep.mubr.f32.mxu0 0.0
        %2174 = vmatmul.mubr.f32.gmra.mrb[0].mxu0 %v1818
        %v2175 = vpop.f32.mrb[0].mxu0
        %v2176 = vadd.f32 %v1665, %v2175
        %v2177 = vpop.f32.mrb[0].mxu0
        %2178 = vmatprep.mubr.f32.mxu0 0.0
        %2179 = vmatmul.mubr.f32.gmra.mrb[0].mxu0 %v1821
        %v2180 = vpop.f32.mrb[0].mxu0
        %v2181 = vadd.f32 %v1665, %v2180
        %v2182 = vpop.f32.mrb[0].mxu0
        %2183 = vmatprep.mubr.f32.mxu0 0.0
        %2184 = vmatmul.mubr.f32.gmra.mrb[0].mxu0 %v1824
        %v2185 = vpop.f32.mrb[0].mxu0
        %v2186 = vadd.f32 %v1665, %v2185
        %v2187 = vpop.f32.mrb[0].mxu0
        %2188 = vmatprep.mubr.f32.mxu0 0.0
        %2189 = vmatmul.mubr.f32.gmra.mrb[0].mxu0 %v1827
        %v2190 = vpop.f32.mrb[0].mxu0
        %v2191 = vadd.f32 %v1665, %v2190
        %v2192 = vpop.f32.mrb[0].mxu0
        %2193 = vmatprep.mubr.f32.mxu0 0.0
        %2194 = vmatmul.mubr.f32.gmra.mrb[0].mxu0 %v1830
        %v2195 = vpop.f32.mrb[0].mxu0
        %v2196 = vadd.f32 %v1665, %v2195
        %v2197 = vpop.f32.mrb[0].mxu0
        %2198 = vmatprep.mubr.f32.mxu0 0.0
        %2199 = vmatmul.mubr.f32.gmra.mrb[0].mxu0 %v1833
        %v2200 = vpop.f32.mrb[0].mxu0
        %v2201 = vadd.f32 %v1665, %v2200
        %v2202 = vpop.f32.mrb[0].mxu0
        %2203 = vmatprep.mubr.f32.mxu0 0.0
        %2204 = vmatmul.mubr.f32.gmra.mrb[0].mxu0 %v1836
        %v2205 = vpop.f32.mrb[0].mxu0
        %v2206 = vadd.f32 %v1665, %v2205
        %v2207 = vpop.f32.mrb[0].mxu0
        %2208 = vmatprep.mubr.f32.mxu0 0.0
        %2209 = vmatmul.mubr.f32.gmra.mrb[0].mxu0 %v1839
        %v2210 = vpop.f32.mrb[0].mxu0
        %v2211 = vadd.f32 %v1665, %v2210
        %v2212 = vpop.f32.mrb[0].mxu0
        %2213 = vmatprep.mubr.f32.mxu0 0.0
        %2214 = vmatmul.mubr.f32.gmra.mrb[0].mxu0 %v1842
        %v2215 = vpop.f32.mrb[0].mxu0
        %v2216 = vadd.f32 %v1665, %v2215
        %v2217 = vpop.f32.mrb[0].mxu0
        %2218 = vmatprep.mubr.f32.mxu0 0.0
        %2219 = vmatmul.mubr.f32.gmra.mrb[0].mxu0 %v1845
        %v2220 = vpop.f32.mrb[0].mxu0
        %v2221 = vadd.f32 %v1665, %v2220
        %v2222 = vpop.f32.mrb[0].mxu0
        %2223 = vmatprep.mubr.f32.mxu0 0.0
        %2224 = vmatmul.mubr.f32.gmra.mrb[0].mxu0 %v1848
        %v2225 = vpop.f32.mrb[0].mxu0
        %v2226 = vadd.f32 %v1665, %v2225
        %v2227 = vpop.f32.mrb[0].mxu0
        %2228 = vmatprep.mubr.f32.mxu0 0.0
        %2229 = vmatmul.mubr.f32.gmra.mrb[0].mxu0 %v1851
        %v2230 = vpop.f32.mrb[0].mxu0
        %v2231 = vadd.f32 %v1665, %v2230
        %v2232 = vpop.f32.mrb[0].mxu0
        %2233 = vmatprep.mubr.f32.mxu0 0.0
        %2234 = vmatmul.mubr.f32.gmra.mrb[0].mxu0 %v1854
        %v2235 = vpop.f32.mrb[0].mxu0
        %v2236 = vadd.f32 %v1665, %v2235
        %v2237 = vpop.f32.mrb[0].mxu0
        %2238 = vmatprep.mubr.f32.mxu0 0.0
        %2239 = vmatmul.mubr.f32.gmra.mrb[0].mxu0 %v1857
        %v2240 = vpop.f32.mrb[0].mxu0
        %v2241 = vadd.f32 %v1665, %v2240
        %v2242 = vpop.f32.mrb[0].mxu0
        %2243 = vdwg.mxu0
        %2244 = vmax.xlane.f32.xlu0 %v1926
        %v2245 = vpop.xlane.xlu0 %2244
        %2246 = vmax.xlane.f32.xlu0 %v1931
        %v2247 = vpop.xlane.xlu0 %2246
        %2248 = vmax.xlane.f32.xlu0 %v1936
        %v2249 = vpop.xlane.xlu0 %2248
        %2250 = vmax.xlane.f32.xlu0 %v1941
        %v2251 = vpop.xlane.xlu0 %2250
        %2252 = vmax.xlane.f32.xlu0 %v1946
        %v2253 = vpop.xlane.xlu0 %2252
        %2254 = vmax.xlane.f32.xlu0 %v1951
        %v2255 = vpop.xlane.xlu0 %2254
        %2256 = vmax.xlane.f32.xlu0 %v1956
        %v2257 = vpop.xlane.xlu0 %2256
        %2258 = vmax.xlane.f32.xlu0 %v1961
        %v2259 = vpop.xlane.xlu0 %2258
        %2260 = vmax.xlane.f32.xlu0 %v1966
        %v2261 = vpop.xlane.xlu0 %2260
        %2262 = vmax.xlane.f32.xlu0 %v1971
        %v2263 = vpop.xlane.xlu0 %2262
        %2264 = vmax.xlane.f32.xlu0 %v1976
        %v2265 = vpop.xlane.xlu0 %2264
        %2266 = vmax.xlane.f32.xlu0 %v1981
        %v2267 = vpop.xlane.xlu0 %2266
        %2268 = vmax.xlane.f32.xlu0 %v1986
        %v2269 = vpop.xlane.xlu0 %2268
        %2270 = vmax.xlane.f32.xlu0 %v1991
        %v2271 = vpop.xlane.xlu0 %2270
        %2272 = vmax.xlane.f32.xlu0 %v1996
        %v2273 = vpop.xlane.xlu0 %2272
        %2274 = vmax.xlane.f32.xlu0 %v2001
        %v2275 = vpop.xlane.xlu0 %2274
        %2276 = vmax.xlane.f32.xlu0 %v2006
        %v2277 = vpop.xlane.xlu0 %2276
        %2278 = vmax.xlane.f32.xlu0 %v2011
        %v2279 = vpop.xlane.xlu0 %2278
        %2280 = vmax.xlane.f32.xlu0 %v2016
        %v2281 = vpop.xlane.xlu0 %2280
        %2282 = vmax.xlane.f32.xlu0 %v2021
        %v2283 = vpop.xlane.xlu0 %2282
        %2284 = vmax.xlane.f32.xlu0 %v2026
        %v2285 = vpop.xlane.xlu0 %2284
        %2286 = vmax.xlane.f32.xlu0 %v2031
        %v2287 = vpop.xlane.xlu0 %2286
        %2288 = vmax.xlane.f32.xlu0 %v2036
        %v2289 = vpop.xlane.xlu0 %2288
        %2290 = vmax.xlane.f32.xlu0 %v2041
        %v2291 = vpop.xlane.xlu0 %2290
        %2292 = vmax.xlane.f32.xlu0 %v2046
        %v2293 = vpop.xlane.xlu0 %2292
        %2294 = vmax.xlane.f32.xlu0 %v2051
        %v2295 = vpop.xlane.xlu0 %2294
        %2296 = vmax.xlane.f32.xlu0 %v2056
        %v2297 = vpop.xlane.xlu0 %2296
        %2298 = vmax.xlane.f32.xlu0 %v2061
        %v2299 = vpop.xlane.xlu0 %2298
        %2300 = vmax.xlane.f32.xlu0 %v2066
        %v2301 = vpop.xlane.xlu0 %2300
        %2302 = vmax.xlane.f32.xlu0 %v2071
        %v2303 = vpop.xlane.xlu0 %2302
        %2304 = vmax.xlane.f32.xlu0 %v2076
        %v2305 = vpop.xlane.xlu0 %2304
        %2306 = vmax.xlane.f32.xlu0 %v2081
        %v2307 = vpop.xlane.xlu0 %2306
        %2308 = vmax.xlane.f32.xlu0 %v2086
        %v2309 = vpop.xlane.xlu0 %2308
        %2310 = vmax.xlane.f32.xlu0 %v2091
        %v2311 = vpop.xlane.xlu0 %2310
        %2312 = vmax.xlane.f32.xlu0 %v2096
        %v2313 = vpop.xlane.xlu0 %2312
        %2314 = vmax.xlane.f32.xlu0 %v2101
        %v2315 = vpop.xlane.xlu0 %2314
        %2316 = vmax.xlane.f32.xlu0 %v2106
        %v2317 = vpop.xlane.xlu0 %2316
        %2318 = vmax.xlane.f32.xlu0 %v2111
        %v2319 = vpop.xlane.xlu0 %2318
        %2320 = vmax.xlane.f32.xlu0 %v2116
        %v2321 = vpop.xlane.xlu0 %2320
        %2322 = vmax.xlane.f32.xlu0 %v2121
        %v2323 = vpop.xlane.xlu0 %2322
        %2324 = vmax.xlane.f32.xlu0 %v2126
        %v2325 = vpop.xlane.xlu0 %2324
        %2326 = vmax.xlane.f32.xlu0 %v2131
        %v2327 = vpop.xlane.xlu0 %2326
        %2328 = vmax.xlane.f32.xlu0 %v2136
        %v2329 = vpop.xlane.xlu0 %2328
        %2330 = vmax.xlane.f32.xlu0 %v2141
        %v2331 = vpop.xlane.xlu0 %2330
        %2332 = vmax.xlane.f32.xlu0 %v2146
        %v2333 = vpop.xlane.xlu0 %2332
        %2334 = vmax.xlane.f32.xlu0 %v2151
        %v2335 = vpop.xlane.xlu0 %2334
        %2336 = vmax.xlane.f32.xlu0 %v2156
        %v2337 = vpop.xlane.xlu0 %2336
        %2338 = vmax.xlane.f32.xlu0 %v2161
        %v2339 = vpop.xlane.xlu0 %2338
        %2340 = vmax.xlane.f32.xlu0 %v2166
        %v2341 = vpop.xlane.xlu0 %2340
        %2342 = vmax.xlane.f32.xlu0 %v2171
        %v2343 = vpop.xlane.xlu0 %2342
        %2344 = vmax.xlane.f32.xlu0 %v2176
        %v2345 = vpop.xlane.xlu0 %2344
        %2346 = vmax.xlane.f32.xlu0 %v2181
        %v2347 = vpop.xlane.xlu0 %2346
        %2348 = vmax.xlane.f32.xlu0 %v2186
        %v2349 = vpop.xlane.xlu0 %2348
        %2350 = vmax.xlane.f32.xlu0 %v2191
        %v2351 = vpop.xlane.xlu0 %2350
        %2352 = vmax.xlane.f32.xlu0 %v2196
        %v2353 = vpop.xlane.xlu0 %2352
        %2354 = vmax.xlane.f32.xlu0 %v2201
        %v2355 = vpop.xlane.xlu0 %2354
        %2356 = vmax.xlane.f32.xlu0 %v2206
        %v2357 = vpop.xlane.xlu0 %2356
        %2358 = vmax.xlane.f32.xlu0 %v2211
        %v2359 = vpop.xlane.xlu0 %2358
        %2360 = vmax.xlane.f32.xlu0 %v2216
        %v2361 = vpop.xlane.xlu0 %2360
        %2362 = vmax.xlane.f32.xlu0 %v2221
        %v2363 = vpop.xlane.xlu0 %2362
        %2364 = vmax.xlane.f32.xlu0 %v2226
        %v2365 = vpop.xlane.xlu0 %2364
        %2366 = vmax.xlane.f32.xlu0 %v2231
        %v2367 = vpop.xlane.xlu0 %2366
        %2368 = vmax.xlane.f32.xlu0 %v2236
        %v2369 = vpop.xlane.xlu0 %2368
        %2370 = vmax.xlane.f32.xlu0 %v2241
        %v2371 = vpop.xlane.xlu0 %2370
        %v2372 = vsub.f32 %v1926, %v2245
        %v2373 = vsub.f32 %v1931, %v2247
        %v2374 = vsub.f32 %v1936, %v2249
        %v2375 = vsub.f32 %v1941, %v2251
        %v2376 = vsub.f32 %v1946, %v2253
        %v2377 = vsub.f32 %v1951, %v2255
        %v2378 = vsub.f32 %v1956, %v2257
        %v2379 = vsub.f32 %v1961, %v2259
        %v2380 = vsub.f32 %v1966, %v2261
        %v2381 = vsub.f32 %v1971, %v2263
        %v2382 = vsub.f32 %v1976, %v2265
        %v2383 = vsub.f32 %v1981, %v2267
        %v2384 = vsub.f32 %v1986, %v2269
        %v2385 = vsub.f32 %v1991, %v2271
        %v2386 = vsub.f32 %v1996, %v2273
        %v2387 = vsub.f32 %v2001, %v2275
        %v2388 = vsub.f32 %v2006, %v2277
        %v2389 = vsub.f32 %v2011, %v2279
        %v2390 = vsub.f32 %v2016, %v2281
        %v2391 = vsub.f32 %v2021, %v2283
        %v2392 = vsub.f32 %v2026, %v2285
        %v2393 = vsub.f32 %v2031, %v2287
        %v2394 = vsub.f32 %v2036, %v2289
        %v2395 = vsub.f32 %v2041, %v2291
        %v2396 = vsub.f32 %v2046, %v2293
        %v2397 = vsub.f32 %v2051, %v2295
        %v2398 = vsub.f32 %v2056, %v2297
        %v2399 = vsub.f32 %v2061, %v2299
        %v2400 = vsub.f32 %v2066, %v2301
        %v2401 = vsub.f32 %v2071, %v2303
        %v2402 = vsub.f32 %v2076, %v2305
        %v2403 = vsub.f32 %v2081, %v2307
        %v2404 = vsub.f32 %v2086, %v2309
        %v2405 = vsub.f32 %v2091, %v2311
        %v2406 = vsub.f32 %v2096, %v2313
        %v2407 = vsub.f32 %v2101, %v2315
        %v2408 = vsub.f32 %v2106, %v2317
        %v2409 = vsub.f32 %v2111, %v2319
        %v2410 = vsub.f32 %v2116, %v2321
        %v2411 = vsub.f32 %v2121, %v2323
        %v2412 = vsub.f32 %v2126, %v2325
        %v2413 = vsub.f32 %v2131, %v2327
        %v2414 = vsub.f32 %v2136, %v2329
        %v2415 = vsub.f32 %v2141, %v2331
        %v2416 = vsub.f32 %v2146, %v2333
        %v2417 = vsub.f32 %v2151, %v2335
        %v2418 = vsub.f32 %v2156, %v2337
        %v2419 = vsub.f32 %v2161, %v2339
        %v2420 = vsub.f32 %v2166, %v2341
        %v2421 = vsub.f32 %v2171, %v2343
        %v2422 = vsub.f32 %v2176, %v2345
        %v2423 = vsub.f32 %v2181, %v2347
        %v2424 = vsub.f32 %v2186, %v2349
        %v2425 = vsub.f32 %v2191, %v2351
        %v2426 = vsub.f32 %v2196, %v2353
        %v2427 = vsub.f32 %v2201, %v2355
        %v2428 = vsub.f32 %v2206, %v2357
        %v2429 = vsub.f32 %v2211, %v2359
        %v2430 = vsub.f32 %v2216, %v2361
        %v2431 = vsub.f32 %v2221, %v2363
        %v2432 = vsub.f32 %v2226, %v2365
        %v2433 = vsub.f32 %v2231, %v2367
        %v2434 = vsub.f32 %v2236, %v2369
        %v2435 = vsub.f32 %v2241, %v2371
        %v2436 = vmul.f32 %v2372, 1.442695
        %v2437 = vpow.pop %v2436
        %v2438 = vmul.f32 %v2373, 1.442695
        %v2439 = vpow.pop %v2438
        %v2440 = vmul.f32 %v2374, 1.442695
        %v2441 = vpow.pop %v2440
        %v2442 = vmul.f32 %v2375, 1.442695
        %v2443 = vpow.pop %v2442
        %v2444 = vmul.f32 %v2376, 1.442695
        %v2445 = vpow.pop %v2444
        %v2446 = vmul.f32 %v2377, 1.442695
        %v2447 = vpow.pop %v2446
        %v2448 = vmul.f32 %v2378, 1.442695
        %v2449 = vpow.pop %v2448
        %v2450 = vmul.f32 %v2379, 1.442695
        %v2451 = vpow.pop %v2450
        %v2452 = vmul.f32 %v2380, 1.442695
        %v2453 = vpow.pop %v2452
        %v2454 = vmul.f32 %v2381, 1.442695
        %v2455 = vpow.pop %v2454
        %v2456 = vmul.f32 %v2382, 1.442695
        %v2457 = vpow.pop %v2456
        %v2458 = vmul.f32 %v2383, 1.442695
        %v2459 = vpow.pop %v2458
        %v2460 = vmul.f32 %v2384, 1.442695
        %v2461 = vpow.pop %v2460
        %v2462 = vmul.f32 %v2385, 1.442695
        %v2463 = vpow.pop %v2462
        %v2464 = vmul.f32 %v2386, 1.442695
        %v2465 = vpow.pop %v2464
        %v2466 = vmul.f32 %v2387, 1.442695
        %v2467 = vpow.pop %v2466
        %v2468 = vmul.f32 %v2388, 1.442695
        %v2469 = vpow.pop %v2468
        %v2470 = vmul.f32 %v2389, 1.442695
        %v2471 = vpow.pop %v2470
        %v2472 = vmul.f32 %v2390, 1.442695
        %v2473 = vpow.pop %v2472
        %v2474 = vmul.f32 %v2391, 1.442695
        %v2475 = vpow.pop %v2474
        %v2476 = vmul.f32 %v2392, 1.442695
        %v2477 = vpow.pop %v2476
        %v2478 = vmul.f32 %v2393, 1.442695
        %v2479 = vpow.pop %v2478
        %v2480 = vmul.f32 %v2394, 1.442695
        %v2481 = vpow.pop %v2480
        %v2482 = vmul.f32 %v2395, 1.442695
        %v2483 = vpow.pop %v2482
        %v2484 = vmul.f32 %v2396, 1.442695
        %v2485 = vpow.pop %v2484
        %v2486 = vmul.f32 %v2397, 1.442695
        %v2487 = vpow.pop %v2486
        %v2488 = vmul.f32 %v2398, 1.442695
        %v2489 = vpow.pop %v2488
        %v2490 = vmul.f32 %v2399, 1.442695
        %v2491 = vpow.pop %v2490
        %v2492 = vmul.f32 %v2400, 1.442695
        %v2493 = vpow.pop %v2492
        %v2494 = vmul.f32 %v2401, 1.442695
        %v2495 = vpow.pop %v2494
        %v2496 = vmul.f32 %v2402, 1.442695
        %v2497 = vpow.pop %v2496
        %v2498 = vmul.f32 %v2403, 1.442695
        %v2499 = vpow.pop %v2498
        %v2500 = vmul.f32 %v2404, 1.442695
        %v2501 = vpow.pop %v2500
        %v2502 = vmul.f32 %v2405, 1.442695
        %v2503 = vpow.pop %v2502
        %v2504 = vmul.f32 %v2406, 1.442695
        %v2505 = vpow.pop %v2504
        %v2506 = vmul.f32 %v2407, 1.442695
        %v2507 = vpow.pop %v2506
        %v2508 = vmul.f32 %v2408, 1.442695
        %v2509 = vpow.pop %v2508
        %v2510 = vmul.f32 %v2409, 1.442695
        %v2511 = vpow.pop %v2510
        %v2512 = vmul.f32 %v2410, 1.442695
        %v2513 = vpow.pop %v2512
        %v2514 = vmul.f32 %v2411, 1.442695
        %v2515 = vpow.pop %v2514
        %v2516 = vmul.f32 %v2412, 1.442695
        %v2517 = vpow.pop %v2516
        %v2518 = vmul.f32 %v2413, 1.442695
        %v2519 = vpow.pop %v2518
        %v2520 = vmul.f32 %v2414, 1.442695
        %v2521 = vpow.pop %v2520
        %v2522 = vmul.f32 %v2415, 1.442695
        %v2523 = vpow.pop %v2522
        %v2524 = vmul.f32 %v2416, 1.442695
        %v2525 = vpow.pop %v2524
        %v2526 = vmul.f32 %v2417, 1.442695
        %v2527 = vpow.pop %v2526
        %v2528 = vmul.f32 %v2418, 1.442695
        %v2529 = vpow.pop %v2528
        %v2530 = vmul.f32 %v2419, 1.442695
        %v2531 = vpow.pop %v2530
        %v2532 = vmul.f32 %v2420, 1.442695
        %v2533 = vpow.pop %v2532
        %v2534 = vmul.f32 %v2421, 1.442695
        %v2535 = vpow.pop %v2534
        %v2536 = vmul.f32 %v2422, 1.442695
        %v2537 = vpow.pop %v2536
        %v2538 = vmul.f32 %v2423, 1.442695
        %v2539 = vpow.pop %v2538
        %v2540 = vmul.f32 %v2424, 1.442695
        %v2541 = vpow.pop %v2540
        %v2542 = vmul.f32 %v2425, 1.442695
        %v2543 = vpow.pop %v2542
        %v2544 = vmul.f32 %v2426, 1.442695
        %v2545 = vpow.pop %v2544
        %v2546 = vmul.f32 %v2427, 1.442695
        %v2547 = vpow.pop %v2546
        %v2548 = vmul.f32 %v2428, 1.442695
        %v2549 = vpow.pop %v2548
        %v2550 = vmul.f32 %v2429, 1.442695
        %v2551 = vpow.pop %v2550
        %v2552 = vmul.f32 %v2430, 1.442695
        %v2553 = vpow.pop %v2552
        %v2554 = vmul.f32 %v2431, 1.442695
        %v2555 = vpow.pop %v2554
        %v2556 = vmul.f32 %v2432, 1.442695
        %v2557 = vpow.pop %v2556
        %v2558 = vmul.f32 %v2433, 1.442695
        %v2559 = vpow.pop %v2558
        %v2560 = vmul.f32 %v2434, 1.442695
        %v2561 = vpow.pop %v2560
        %v2562 = vmul.f32 %v2435, 1.442695
        %v2563 = vpow.pop %v2562
        %2564 = vadd.xlane.f32.xlu0 %v2437
        %v2565 = vpop.xlane.xlu0 %2564
        %2566 = vadd.xlane.f32.xlu0 %v2439
        %v2567 = vpop.xlane.xlu0 %2566
        %2568 = vadd.xlane.f32.xlu0 %v2441
        %v2569 = vpop.xlane.xlu0 %2568
        %2570 = vadd.xlane.f32.xlu0 %v2443
        %v2571 = vpop.xlane.xlu0 %2570
        %2572 = vadd.xlane.f32.xlu0 %v2445
        %v2573 = vpop.xlane.xlu0 %2572
        %2574 = vadd.xlane.f32.xlu0 %v2447
        %v2575 = vpop.xlane.xlu0 %2574
        %2576 = vadd.xlane.f32.xlu0 %v2449
        %v2577 = vpop.xlane.xlu0 %2576
        %2578 = vadd.xlane.f32.xlu0 %v2451
        %v2579 = vpop.xlane.xlu0 %2578
        %2580 = vadd.xlane.f32.xlu0 %v2453
        %v2581 = vpop.xlane.xlu0 %2580
        %2582 = vadd.xlane.f32.xlu0 %v2455
        %v2583 = vpop.xlane.xlu0 %2582
        %2584 = vadd.xlane.f32.xlu0 %v2457
        %v2585 = vpop.xlane.xlu0 %2584
        %2586 = vadd.xlane.f32.xlu0 %v2459
        %v2587 = vpop.xlane.xlu0 %2586
        %2588 = vadd.xlane.f32.xlu0 %v2461
        %v2589 = vpop.xlane.xlu0 %2588
        %2590 = vadd.xlane.f32.xlu0 %v2463
        %v2591 = vpop.xlane.xlu0 %2590
        %2592 = vadd.xlane.f32.xlu0 %v2465
        %v2593 = vpop.xlane.xlu0 %2592
        %2594 = vadd.xlane.f32.xlu0 %v2467
        %v2595 = vpop.xlane.xlu0 %2594
        %2596 = vadd.xlane.f32.xlu0 %v2469
        %v2597 = vpop.xlane.xlu0 %2596
        %2598 = vadd.xlane.f32.xlu0 %v2471
        %v2599 = vpop.xlane.xlu0 %2598
        %2600 = vadd.xlane.f32.xlu0 %v2473
        %v2601 = vpop.xlane.xlu0 %2600
        %2602 = vadd.xlane.f32.xlu0 %v2475
        %v2603 = vpop.xlane.xlu0 %2602
        %2604 = vadd.xlane.f32.xlu0 %v2477
        %v2605 = vpop.xlane.xlu0 %2604
        %2606 = vadd.xlane.f32.xlu0 %v2479
        %v2607 = vpop.xlane.xlu0 %2606
        %2608 = vadd.xlane.f32.xlu0 %v2481
        %v2609 = vpop.xlane.xlu0 %2608
        %2610 = vadd.xlane.f32.xlu0 %v2483
        %v2611 = vpop.xlane.xlu0 %2610
        %2612 = vadd.xlane.f32.xlu0 %v2485
        %v2613 = vpop.xlane.xlu0 %2612
        %2614 = vadd.xlane.f32.xlu0 %v2487
        %v2615 = vpop.xlane.xlu0 %2614
        %2616 = vadd.xlane.f32.xlu0 %v2489
        %v2617 = vpop.xlane.xlu0 %2616
        %2618 = vadd.xlane.f32.xlu0 %v2491
        %v2619 = vpop.xlane.xlu0 %2618
        %2620 = vadd.xlane.f32.xlu0 %v2493
        %v2621 = vpop.xlane.xlu0 %2620
        %2622 = vadd.xlane.f32.xlu0 %v2495
        %v2623 = vpop.xlane.xlu0 %2622
        %2624 = vadd.xlane.f32.xlu0 %v2497
        %v2625 = vpop.xlane.xlu0 %2624
        %2626 = vadd.xlane.f32.xlu0 %v2499
        %v2627 = vpop.xlane.xlu0 %2626
        %2628 = vadd.xlane.f32.xlu0 %v2501
        %v2629 = vpop.xlane.xlu0 %2628
        %2630 = vadd.xlane.f32.xlu0 %v2503
        %v2631 = vpop.xlane.xlu0 %2630
        %2632 = vadd.xlane.f32.xlu0 %v2505
        %v2633 = vpop.xlane.xlu0 %2632
        %2634 = vadd.xlane.f32.xlu0 %v2507
        %v2635 = vpop.xlane.xlu0 %2634
        %2636 = vadd.xlane.f32.xlu0 %v2509
        %v2637 = vpop.xlane.xlu0 %2636
        %2638 = vadd.xlane.f32.xlu0 %v2511
        %v2639 = vpop.xlane.xlu0 %2638
        %2640 = vadd.xlane.f32.xlu0 %v2513
        %v2641 = vpop.xlane.xlu0 %2640
        %2642 = vadd.xlane.f32.xlu0 %v2515
        %v2643 = vpop.xlane.xlu0 %2642
        %2644 = vadd.xlane.f32.xlu0 %v2517
        %v2645 = vpop.xlane.xlu0 %2644
        %2646 = vadd.xlane.f32.xlu0 %v2519
        %v2647 = vpop.xlane.xlu0 %2646
        %2648 = vadd.xlane.f32.xlu0 %v2521
        %v2649 = vpop.xlane.xlu0 %2648
        %2650 = vadd.xlane.f32.xlu0 %v2523
        %v2651 = vpop.xlane.xlu0 %2650
        %2652 = vadd.xlane.f32.xlu0 %v2525
        %v2653 = vpop.xlane.xlu0 %2652
        %2654 = vadd.xlane.f32.xlu0 %v2527
        %v2655 = vpop.xlane.xlu0 %2654
        %2656 = vadd.xlane.f32.xlu0 %v2529
        %v2657 = vpop.xlane.xlu0 %2656
        %2658 = vadd.xlane.f32.xlu0 %v2531
        %v2659 = vpop.xlane.xlu0 %2658
        %2660 = vadd.xlane.f32.xlu0 %v2533
        %v2661 = vpop.xlane.xlu0 %2660
        %2662 = vadd.xlane.f32.xlu0 %v2535
        %v2663 = vpop.xlane.xlu0 %2662
        %2664 = vadd.xlane.f32.xlu0 %v2537
        %v2665 = vpop.xlane.xlu0 %2664
        %2666 = vadd.xlane.f32.xlu0 %v2539
        %v2667 = vpop.xlane.xlu0 %2666
        %2668 = vadd.xlane.f32.xlu0 %v2541
        %v2669 = vpop.xlane.xlu0 %2668
        %2670 = vadd.xlane.f32.xlu0 %v2543
        %v2671 = vpop.xlane.xlu0 %2670
        %2672 = vadd.xlane.f32.xlu0 %v2545
        %v2673 = vpop.xlane.xlu0 %2672
        %2674 = vadd.xlane.f32.xlu0 %v2547
        %v2675 = vpop.xlane.xlu0 %2674
        %2676 = vadd.xlane.f32.xlu0 %v2549
        %v2677 = vpop.xlane.xlu0 %2676
        %2678 = vadd.xlane.f32.xlu0 %v2551
        %v2679 = vpop.xlane.xlu0 %2678
        %2680 = vadd.xlane.f32.xlu0 %v2553
        %v2681 = vpop.xlane.xlu0 %2680
        %2682 = vadd.xlane.f32.xlu0 %v2555
        %v2683 = vpop.xlane.xlu0 %2682
        %2684 = vadd.xlane.f32.xlu0 %v2557
        %v2685 = vpop.xlane.xlu0 %2684
        %2686 = vadd.xlane.f32.xlu0 %v2559
        %v2687 = vpop.xlane.xlu0 %2686
        %2688 = vadd.xlane.f32.xlu0 %v2561
        %v2689 = vpop.xlane.xlu0 %2688
        %2690 = vadd.xlane.f32.xlu0 %v2563
        %v2691 = vpop.xlane.xlu0 %2690
        %v2692 = vlog2.pop %v2565
        %v2693 = vmul.f32 %v2692, 0.6931472
        %v2694 = vlog2.pop %v2567
        %v2695 = vmul.f32 %v2694, 0.6931472
        %v2696 = vlog2.pop %v2569
        %v2697 = vmul.f32 %v2696, 0.6931472
        %v2698 = vlog2.pop %v2571
        %v2699 = vmul.f32 %v2698, 0.6931472
        %v2700 = vlog2.pop %v2573
        %v2701 = vmul.f32 %v2700, 0.6931472
        %v2702 = vlog2.pop %v2575
        %v2703 = vmul.f32 %v2702, 0.6931472
        %v2704 = vlog2.pop %v2577
        %v2705 = vmul.f32 %v2704, 0.6931472
        %v2706 = vlog2.pop %v2579
        %v2707 = vmul.f32 %v2706, 0.6931472
        %v2708 = vlog2.pop %v2581
        %v2709 = vmul.f32 %v2708, 0.6931472
        %v2710 = vlog2.pop %v2583
        %v2711 = vmul.f32 %v2710, 0.6931472
        %v2712 = vlog2.pop %v2585
        %v2713 = vmul.f32 %v2712, 0.6931472
        %v2714 = vlog2.pop %v2587
        %v2715 = vmul.f32 %v2714, 0.6931472
        %v2716 = vlog2.pop %v2589
        %v2717 = vmul.f32 %v2716, 0.6931472
        %v2718 = vlog2.pop %v2591
        %v2719 = vmul.f32 %v2718, 0.6931472
        %v2720 = vlog2.pop %v2593
        %v2721 = vmul.f32 %v2720, 0.6931472
        %v2722 = vlog2.pop %v2595
        %v2723 = vmul.f32 %v2722, 0.6931472
        %v2724 = vlog2.pop %v2597
        %v2725 = vmul.f32 %v2724, 0.6931472
        %v2726 = vlog2.pop %v2599
        %v2727 = vmul.f32 %v2726, 0.6931472
        %v2728 = vlog2.pop %v2601
        %v2729 = vmul.f32 %v2728, 0.6931472
        %v2730 = vlog2.pop %v2603
        %v2731 = vmul.f32 %v2730, 0.6931472
        %v2732 = vlog2.pop %v2605
        %v2733 = vmul.f32 %v2732, 0.6931472
        %v2734 = vlog2.pop %v2607
        %v2735 = vmul.f32 %v2734, 0.6931472
        %v2736 = vlog2.pop %v2609
        %v2737 = vmul.f32 %v2736, 0.6931472
        %v2738 = vlog2.pop %v2611
        %v2739 = vmul.f32 %v2738, 0.6931472
        %v2740 = vlog2.pop %v2613
        %v2741 = vmul.f32 %v2740, 0.6931472
        %v2742 = vlog2.pop %v2615
        %v2743 = vmul.f32 %v2742, 0.6931472
        %v2744 = vlog2.pop %v2617
        %v2745 = vmul.f32 %v2744, 0.6931472
        %v2746 = vlog2.pop %v2619
        %v2747 = vmul.f32 %v2746, 0.6931472
        %v2748 = vlog2.pop %v2621
        %v2749 = vmul.f32 %v2748, 0.6931472
        %v2750 = vlog2.pop %v2623
        %v2751 = vmul.f32 %v2750, 0.6931472
        %v2752 = vlog2.pop %v2625
        %v2753 = vmul.f32 %v2752, 0.6931472
        %v2754 = vlog2.pop %v2627
        %v2755 = vmul.f32 %v2754, 0.6931472
        %v2756 = vlog2.pop %v2629
        %v2757 = vmul.f32 %v2756, 0.6931472
        %v2758 = vlog2.pop %v2631
        %v2759 = vmul.f32 %v2758, 0.6931472
        %v2760 = vlog2.pop %v2633
        %v2761 = vmul.f32 %v2760, 0.6931472
        %v2762 = vlog2.pop %v2635
        %v2763 = vmul.f32 %v2762, 0.6931472
        %v2764 = vlog2.pop %v2637
        %v2765 = vmul.f32 %v2764, 0.6931472
        %v2766 = vlog2.pop %v2639
        %v2767 = vmul.f32 %v2766, 0.6931472
        %v2768 = vlog2.pop %v2641
        %v2769 = vmul.f32 %v2768, 0.6931472
        %v2770 = vlog2.pop %v2643
        %v2771 = vmul.f32 %v2770, 0.6931472
        %v2772 = vlog2.pop %v2645
        %v2773 = vmul.f32 %v2772, 0.6931472
        %v2774 = vlog2.pop %v2647
        %v2775 = vmul.f32 %v2774, 0.6931472
        %v2776 = vlog2.pop %v2649
        %v2777 = vmul.f32 %v2776, 0.6931472
        %v2778 = vlog2.pop %v2651
        %v2779 = vmul.f32 %v2778, 0.6931472
        %v2780 = vlog2.pop %v2653
        %v2781 = vmul.f32 %v2780, 0.6931472
        %v2782 = vlog2.pop %v2655
        %v2783 = vmul.f32 %v2782, 0.6931472
        %v2784 = vlog2.pop %v2657
        %v2785 = vmul.f32 %v2784, 0.6931472
        %v2786 = vlog2.pop %v2659
        %v2787 = vmul.f32 %v2786, 0.6931472
        %v2788 = vlog2.pop %v2661
        %v2789 = vmul.f32 %v2788, 0.6931472
        %v2790 = vlog2.pop %v2663
        %v2791 = vmul.f32 %v2790, 0.6931472
        %v2792 = vlog2.pop %v2665
        %v2793 = vmul.f32 %v2792, 0.6931472
        %v2794 = vlog2.pop %v2667
        %v2795 = vmul.f32 %v2794, 0.6931472
        %v2796 = vlog2.pop %v2669
        %v2797 = vmul.f32 %v2796, 0.6931472
        %v2798 = vlog2.pop %v2671
        %v2799 = vmul.f32 %v2798, 0.6931472
        %v2800 = vlog2.pop %v2673
        %v2801 = vmul.f32 %v2800, 0.6931472
        %v2802 = vlog2.pop %v2675
        %v2803 = vmul.f32 %v2802, 0.6931472
        %v2804 = vlog2.pop %v2677
        %v2805 = vmul.f32 %v2804, 0.6931472
        %v2806 = vlog2.pop %v2679
        %v2807 = vmul.f32 %v2806, 0.6931472
        %v2808 = vlog2.pop %v2681
        %v2809 = vmul.f32 %v2808, 0.6931472
        %v2810 = vlog2.pop %v2683
        %v2811 = vmul.f32 %v2810, 0.6931472
        %v2812 = vlog2.pop %v2685
        %v2813 = vmul.f32 %v2812, 0.6931472
        %v2814 = vlog2.pop %v2687
        %v2815 = vmul.f32 %v2814, 0.6931472
        %v2816 = vlog2.pop %v2689
        %v2817 = vmul.f32 %v2816, 0.6931472
        %v2818 = vlog2.pop %v2691
        %v2819 = vmul.f32 %v2818, 0.6931472
        %v2820 = vadd.f32 %v2245, %v2693
        %v2821 = vadd.f32 %v2247, %v2695
        %v2822 = vadd.f32 %v2249, %v2697
        %v2823 = vadd.f32 %v2251, %v2699
        %v2824 = vadd.f32 %v2253, %v2701
        %v2825 = vadd.f32 %v2255, %v2703
        %v2826 = vadd.f32 %v2257, %v2705
        %v2827 = vadd.f32 %v2259, %v2707
        %v2828 = vadd.f32 %v2261, %v2709
        %v2829 = vadd.f32 %v2263, %v2711
        %v2830 = vadd.f32 %v2265, %v2713
        %v2831 = vadd.f32 %v2267, %v2715
        %v2832 = vadd.f32 %v2269, %v2717
        %v2833 = vadd.f32 %v2271, %v2719
        %v2834 = vadd.f32 %v2273, %v2721
        %v2835 = vadd.f32 %v2275, %v2723
        %v2836 = vadd.f32 %v2277, %v2725
        %v2837 = vadd.f32 %v2279, %v2727
        %v2838 = vadd.f32 %v2281, %v2729
        %v2839 = vadd.f32 %v2283, %v2731
        %v2840 = vadd.f32 %v2285, %v2733
        %v2841 = vadd.f32 %v2287, %v2735
        %v2842 = vadd.f32 %v2289, %v2737
        %v2843 = vadd.f32 %v2291, %v2739
        %v2844 = vadd.f32 %v2293, %v2741
        %v2845 = vadd.f32 %v2295, %v2743
        %v2846 = vadd.f32 %v2297, %v2745
        %v2847 = vadd.f32 %v2299, %v2747
        %v2848 = vadd.f32 %v2301, %v2749
        %v2849 = vadd.f32 %v2303, %v2751
        %v2850 = vadd.f32 %v2305, %v2753
        %v2851 = vadd.f32 %v2307, %v2755
        %v2852 = vadd.f32 %v2309, %v2757
        %v2853 = vadd.f32 %v2311, %v2759
        %v2854 = vadd.f32 %v2313, %v2761
        %v2855 = vadd.f32 %v2315, %v2763
        %v2856 = vadd.f32 %v2317, %v2765
        %v2857 = vadd.f32 %v2319, %v2767
        %v2858 = vadd.f32 %v2321, %v2769
        %v2859 = vadd.f32 %v2323, %v2771
        %v2860 = vadd.f32 %v2325, %v2773
        %v2861 = vadd.f32 %v2327, %v2775
        %v2862 = vadd.f32 %v2329, %v2777
        %v2863 = vadd.f32 %v2331, %v2779
        %v2864 = vadd.f32 %v2333, %v2781
        %v2865 = vadd.f32 %v2335, %v2783
        %v2866 = vadd.f32 %v2337, %v2785
        %v2867 = vadd.f32 %v2339, %v2787
        %v2868 = vadd.f32 %v2341, %v2789
        %v2869 = vadd.f32 %v2343, %v2791
        %v2870 = vadd.f32 %v2345, %v2793
        %v2871 = vadd.f32 %v2347, %v2795
        %v2872 = vadd.f32 %v2349, %v2797
        %v2873 = vadd.f32 %v2351, %v2799
        %v2874 = vadd.f32 %v2353, %v2801
        %v2875 = vadd.f32 %v2355, %v2803
        %v2876 = vadd.f32 %v2357, %v2805
        %v2877 = vadd.f32 %v2359, %v2807
        %v2878 = vadd.f32 %v2361, %v2809
        %v2879 = vadd.f32 %v2363, %v2811
        %v2880 = vadd.f32 %v2365, %v2813
        %v2881 = vadd.f32 %v2367, %v2815
        %v2882 = vadd.f32 %v2369, %v2817
        %v2883 = vadd.f32 %v2371, %v2819
        %v2884 = vsub.f32 %v1926, %v2820
        %v2885 = vsub.f32 %v1931, %v2821
        %v2886 = vsub.f32 %v1936, %v2822
        %v2887 = vsub.f32 %v1941, %v2823
        %v2888 = vsub.f32 %v1946, %v2824
        %v2889 = vsub.f32 %v1951, %v2825
        %v2890 = vsub.f32 %v1956, %v2826
        %v2891 = vsub.f32 %v1961, %v2827
        %v2892 = vsub.f32 %v1966, %v2828
        %v2893 = vsub.f32 %v1971, %v2829
        %v2894 = vsub.f32 %v1976, %v2830
        %v2895 = vsub.f32 %v1981, %v2831
        %v2896 = vsub.f32 %v1986, %v2832
        %v2897 = vsub.f32 %v1991, %v2833
        %v2898 = vsub.f32 %v1996, %v2834
        %v2899 = vsub.f32 %v2001, %v2835
        %v2900 = vsub.f32 %v2006, %v2836
        %v2901 = vsub.f32 %v2011, %v2837
        %v2902 = vsub.f32 %v2016, %v2838
        %v2903 = vsub.f32 %v2021, %v2839
        %v2904 = vsub.f32 %v2026, %v2840
        %v2905 = vsub.f32 %v2031, %v2841
        %v2906 = vsub.f32 %v2036, %v2842
        %v2907 = vsub.f32 %v2041, %v2843
        %v2908 = vsub.f32 %v2046, %v2844
        %v2909 = vsub.f32 %v2051, %v2845
        %v2910 = vsub.f32 %v2056, %v2846
        %v2911 = vsub.f32 %v2061, %v2847
        %v2912 = vsub.f32 %v2066, %v2848
        %v2913 = vsub.f32 %v2071, %v2849
        %v2914 = vsub.f32 %v2076, %v2850
        %v2915 = vsub.f32 %v2081, %v2851
        %v2916 = vsub.f32 %v2086, %v2852
        %v2917 = vsub.f32 %v2091, %v2853
        %v2918 = vsub.f32 %v2096, %v2854
        %v2919 = vsub.f32 %v2101, %v2855
        %v2920 = vsub.f32 %v2106, %v2856
        %v2921 = vsub.f32 %v2111, %v2857
        %v2922 = vsub.f32 %v2116, %v2858
        %v2923 = vsub.f32 %v2121, %v2859
        %v2924 = vsub.f32 %v2126, %v2860
        %v2925 = vsub.f32 %v2131, %v2861
        %v2926 = vsub.f32 %v2136, %v2862
        %v2927 = vsub.f32 %v2141, %v2863
        %v2928 = vsub.f32 %v2146, %v2864
        %v2929 = vsub.f32 %v2151, %v2865
        %v2930 = vsub.f32 %v2156, %v2866
        %v2931 = vsub.f32 %v2161, %v2867
        %v2932 = vsub.f32 %v2166, %v2868
        %v2933 = vsub.f32 %v2171, %v2869
        %v2934 = vsub.f32 %v2176, %v2870
        %v2935 = vsub.f32 %v2181, %v2871
        %v2936 = vsub.f32 %v2186, %v2872
        %v2937 = vsub.f32 %v2191, %v2873
        %v2938 = vsub.f32 %v2196, %v2874
        %v2939 = vsub.f32 %v2201, %v2875
        %v2940 = vsub.f32 %v2206, %v2876
        %v2941 = vsub.f32 %v2211, %v2877
        %v2942 = vsub.f32 %v2216, %v2878
        %v2943 = vsub.f32 %v2221, %v2879
        %v2944 = vsub.f32 %v2226, %v2880
        %v2945 = vsub.f32 %v2231, %v2881
        %v2946 = vsub.f32 %v2236, %v2882
        %v2947 = vsub.f32 %v2241, %v2883
        %2948 = vst [vmem:[%s272] sm:$0xff] %v2884
        %2949 = vst [vmem:[%s272 + $0x8] sm:$0xff] %v2885
        %2950 = vst [vmem:[%s272 + $0x10] sm:$0xff] %v2886
        %2951 = vst [vmem:[%s272 + $0x18] sm:$0xff] %v2887
        %2952 = vst [vmem:[%s272 + $0x20] sm:$0xff] %v2888
        %2953 = vst [vmem:[%s272 + $0x28] sm:$0xff] %v2889
        %2954 = vst [vmem:[%s272 + $0x30] sm:$0xff] %v2890
        %2955 = vst [vmem:[%s272 + $0x38] sm:$0xff] %v2891
        %2956 = vst [vmem:[%s272 + $0x40] sm:$0xff] %v2892
        %2957 = vst [vmem:[%s272 + $0x48] sm:$0xff] %v2893
        %2958 = vst [vmem:[%s272 + $0x50] sm:$0xff] %v2894
        %2959 = vst [vmem:[%s272 + $0x58] sm:$0xff] %v2895
        %2960 = vst [vmem:[%s272 + $0x60] sm:$0xff] %v2896
        %2961 = vst [vmem:[%s272 + $0x68] sm:$0xff] %v2897
        %2962 = vst [vmem:[%s272 + $0x70] sm:$0xff] %v2898
        %2963 = vst [vmem:[%s272 + $0x78] sm:$0xff] %v2899
        %2964 = vst [vmem:[%s272 + $0x80] sm:$0xff] %v2900
        %2965 = vst [vmem:[%s272 + $0x88] sm:$0xff] %v2901
        %2966 = vst [vmem:[%s272 + $0x90] sm:$0xff] %v2902
        %2967 = vst [vmem:[%s272 + $0x98] sm:$0xff] %v2903
        %2968 = vst [vmem:[%s272 + $0xa0] sm:$0xff] %v2904
        %2969 = vst [vmem:[%s272 + $0xa8] sm:$0xff] %v2905
        %2970 = vst [vmem:[%s272 + $0xb0] sm:$0xff] %v2906
        %2971 = vst [vmem:[%s272 + $0xb8] sm:$0xff] %v2907
        %2972 = vst [vmem:[%s272 + $0xc0] sm:$0xff] %v2908
        %2973 = vst [vmem:[%s272 + $0xc8] sm:$0xff] %v2909
        %2974 = vst [vmem:[%s272 + $0xd0] sm:$0xff] %v2910
        %2975 = vst [vmem:[%s272 + $0xd8] sm:$0xff] %v2911
        %2976 = vst [vmem:[%s272 + $0xe0] sm:$0xff] %v2912
        %2977 = vst [vmem:[%s272 + $0xe8] sm:$0xff] %v2913
        %2978 = vst [vmem:[%s272 + $0xf0] sm:$0xff] %v2914
        %2979 = vst [vmem:[%s272 + $0xf8] sm:$0xff] %v2915
        %2980 = vst [vmem:[%s272 + $0x100] sm:$0xff] %v2916
        %2981 = vst [vmem:[%s272 + $0x108] sm:$0xff] %v2917
        %2982 = vst [vmem:[%s272 + $0x110] sm:$0xff] %v2918
        %2983 = vst [vmem:[%s272 + $0x118] sm:$0xff] %v2919
        %2984 = vst [vmem:[%s272 + $0x120] sm:$0xff] %v2920
        %2985 = vst [vmem:[%s272 + $0x128] sm:$0xff] %v2921
        %2986 = vst [vmem:[%s272 + $0x130] sm:$0xff] %v2922
        %2987 = vst [vmem:[%s272 + $0x138] sm:$0xff] %v2923
        %2988 = vst [vmem:[%s272 + $0x140] sm:$0xff] %v2924
        %2989 = vst [vmem:[%s272 + $0x148] sm:$0xff] %v2925
        %2990 = vst [vmem:[%s272 + $0x150] sm:$0xff] %v2926
        %2991 = vst [vmem:[%s272 + $0x158] sm:$0xff] %v2927
        %2992 = vst [vmem:[%s272 + $0x160] sm:$0xff] %v2928
        %2993 = vst [vmem:[%s272 + $0x168] sm:$0xff] %v2929
        %2994 = vst [vmem:[%s272 + $0x170] sm:$0xff] %v2930
        %2995 = vst [vmem:[%s272 + $0x178] sm:$0xff] %v2931
        %2996 = vst [vmem:[%s272 + $0x180] sm:$0xff] %v2932
        %2997 = vst [vmem:[%s272 + $0x188] sm:$0xff] %v2933
        %2998 = vst [vmem:[%s272 + $0x190] sm:$0xff] %v2934
        %2999 = vst [vmem:[%s272 + $0x198] sm:$0xff] %v2935
        %3000 = vst [vmem:[%s272 + $0x1a0] sm:$0xff] %v2936
        %3001 = vst [vmem:[%s272 + $0x1a8] sm:$0xff] %v2937
        %3002 = vst [vmem:[%s272 + $0x1b0] sm:$0xff] %v2938
        %3003 = vst [vmem:[%s272 + $0x1b8] sm:$0xff] %v2939
        %3004 = vst [vmem:[%s272 + $0x1c0] sm:$0xff] %v2940
        %3005 = vst [vmem:[%s272 + $0x1c8] sm:$0xff] %v2941
        %3006 = vst [vmem:[%s272 + $0x1d0] sm:$0xff] %v2942
        %3007 = vst [vmem:[%s272 + $0x1d8] sm:$0xff] %v2943
        %3008 = vst [vmem:[%s272 + $0x1e0] sm:$0xff] %v2944
        %3009 = vst [vmem:[%s272 + $0x1e8] sm:$0xff] %v2945
        %3010 = vst [vmem:[%s272 + $0x1f0] sm:$0xff] %v2946
        %3011 = vst [vmem:[%s272 + $0x1f8] sm:$0xff] %v2947
        %s3012 = sand.u32 %s181, 1
        %s3013 = scalar_lea.sflag [#allocation3], %s3012
        %s3014 = sand.u32 %s181, 1
        %s3015 = smul.addr %s3014, 512
        %s3016 = scalar_lea.vmem [#allocation2], %s3015
        // Predicated region
        $region49: #{tpu_custom_call.1} parent=47 // pred_check
          %p3017 = pneg %p191
        $region50: #{tpu_custom_call.1} parent=47 // pred_check_branch
          %3019 = sbr.rel (%p3017) target = $region52
        $region51: #{tpu_custom_call.1} parent=47 // pred_region
          %s3020 = smul.u32 64, %s21
          %s3022 = ssub.s32 8192, 8192
          %3023 = vsyncadd %s3013, %s3022
          %s3024 = smul.addr %s3020, 128
          %s3025 = scalar_lea.hbm %s7, %s3024
          %s3026 = sshll.u32 %s3016, 4
          %s3027 = int_to_ptr.vmem [resolvable:$true] %s3026
          %3032 = dma.vmem_to_hbm [thread:$0]  %s3027, 8192, %s3025, %s3013, 128, 128, 8
        $region52: #{tpu_custom_call.1} parent=47 // pred_fallthru
          _
      $region48: #{tpu_custom_call.1} parent=5 // pred_fallthru
        _
      %p3033 = scmp.le.s32.totalorder 2, %s16
      // Predicated region
      $region53: #{tpu_custom_call.1} parent=5 // pred_check
        %p3034 = pneg %p3033
      $region54: #{tpu_custom_call.1} parent=5 // pred_check_branch
        %3036 = sbr.rel (%p3034) target = $region56
      $region55: #{tpu_custom_call.1} parent=5 // pred_region
        %s3037 = ssub.s32 %s16, 2
        // Predicated region
        $region57: #{tpu_custom_call.1} parent=55 // pred_check
          %p3038 = pneg %p197
        $region58: #{tpu_custom_call.1} parent=55 // pred_check_branch
          %3040 = sbr.rel (%p3038) target = $region60
        $region59: #{tpu_custom_call.1} parent=55 // pred_region
          %s3041 = sand.u32 %s182, 1
          %s3042 = scalar_lea.sflag [#allocation3], %s3041
          %s3043 = sand.u32 %s182, 1
          %s3044 = smul.addr %s3043, 512
          %s3045 = scalar_lea.vmem [#allocation2], %s3044
          %3046 = dma.done %s3042, 8192
        $region60: #{tpu_custom_call.1} parent=55 // pred_fallthru
          _
      $region56: #{tpu_custom_call.1} parent=5 // pred_fallthru
        _
    $region6: #{tpu_custom_call.1} parent=1 // loop_footer
      %s20 = sadd.s32 1, %s16
    $region7: #{tpu_custom_call.1} parent=1 // loop_footer_branch
      %15 = sbr.rel target = $region3
    $region8: #{tpu_custom_call.1} parent=1 // loop_exit
      _
    %3047 = vsyncpa [#allocation3], 1
    %s3048 = scalar_lea.sflag [#allocation3], 1
    %3049 = vsyncpa %s3048, 1

</llo_original>
